<compile_context>
chip_gen: v7x
topology: tpu7x:2x2x1
jax: 0.10.0
libtpu: 0.0.40
codegen_flags: <defaults>
</compile_context>

<pallas_src>
import math
import functools

import jax
import jax.numpy as jnp
from jax import lax
from jax.experimental import pallas as pl
from jax.experimental.pallas import tpu as pltpu

# --- KANLinear static hyperparameters (module defaults) ---
GRID_SIZE = 5
SPLINE_ORDER = 3
NUM_BASIS = GRID_SIZE + SPLINE_ORDER             # 8
NUM_GRID_PTS = GRID_SIZE + 2 * SPLINE_ORDER + 1  # 12

_MIB = 1024 * 1024


def _clamp_vmem(nbytes):
    # Floor at the largest cross-gen default scoped limit (32 MiB), cap at v7x's
    # 64 MiB physical VMEM; tile sizes are chosen so the real footprint fits.
    return int(min(max(nbytes, 32 * _MIB), 64 * _MIB))


# ----------------------------- Pallas kernels -----------------------------

def kan_linear_kernel(x_ref, grid_ref, invden_ref, base_w_ref, spline_w_ref, out_ref):
    """KANLinear forward on one (row tile, out-feature tile) block.

    x_ref:        (TM, in)                        input rows
    grid_ref:     (NUM_GRID_PTS, in)              spline grid (grid.T of torch buffer), f32
    invden_ref:   (SPLINE_ORDER*NUM_GRID_PTS, in) reciprocal Cox-de Boor denominators, f32
    base_w_ref:   (in, TN)                        base_weight.T column stripe (bf16)
    spline_w_ref: (NUM_BASIS*in, TN)              scaled_spline_weight, basis-major (bf16)
    out_ref:      (TM, TN)
    """
    x = x_ref[...].astype(jnp.float32)

    # Grid rows loaded once and reused (hoisted out of the recursion loops).
    g = [grid_ref[j:j + 1, :] for j in range(NUM_GRID_PTS)]        # each (1, in)

    def invden(k, j):                                              # (1, in)
        r = (k - 1) * NUM_GRID_PTS + j
        return invden_ref[r:r + 1, :]

    # Base branch: SiLU(x) @ W_base^T  (bf16 operands, f32 accumulation on the MXU).
    silu = x * jax.nn.sigmoid(x)
    acc = jnp.dot(silu.astype(base_w_ref.dtype), base_w_ref[...],
                  preferred_element_type=jnp.float32)

    # B-spline bases via Cox-de Boor recursion, kept in f32 (accurate + v5e-safe).
    # TODO(synk): on v6e/v7x the recursion could run in bf16 to double VPU throughput.
    bases = [
        jnp.where(jnp.logical_and(x >= g[j], x < g[j + 1]), 1.0, 0.0).astype(jnp.float32)
        for j in range(NUM_GRID_PTS - 1)
    ]
    for k in range(1, SPLINE_ORDER + 1):
        new_bases = []
        for j in range(len(bases) - 1):
            t1 = (x - g[j]) * invden(k, j) * bases[j]
            t2 = (g[j + k + 1] - x) * invden(k, j + 1) * bases[j + 1]
            new_bases.append(t1 + t2)
        bases = new_bases

    # Spline branch: ONE fused MXU matmul with K = NUM_BASIS*in.
    # TODO(synk): on v7x (MRB) the concat could be replaced by 8 accumulating matmuls.
    basis_mat = jnp.concatenate(bases, axis=1).astype(spline_w_ref.dtype)
    acc = acc + jnp.dot(basis_mat, spline_w_ref[...],
                        preferred_element_type=jnp.float32)

    out_ref[...] = acc.astype(out_ref.dtype)


def flash_sdpa_kernel(q_ref, k_ref, v_ref, o_ref, m_sc, l_sc, acc_sc, *, scale):
    """Flash-style SDPA: one (batch, head, q_tile) per output block, kv tiles reduced.

    q_ref: (TQ, DH)   k_ref/v_ref: (TK, DH)   o_ref: (TQ, DH)
    m_sc/l_sc: (TQ, 1) f32 scratch    acc_sc: (TQ, DH) f32 scratch
    """
    ki = pl.program_id(3)

    @pl.when(ki == 0)
    def _():
        m_sc[...] = jnp.full(m_sc.shape, -jnp.inf, dtype=m_sc.dtype)
        l_sc[...] = jnp.zeros(l_sc.shape, dtype=l_sc.dtype)
        acc_sc[...] = jnp.zeros(acc_sc.shape, dtype=acc_sc.dtype)

    q = q_ref[...]
    k = k_ref[...]
    v = v_ref[...]

    # q @ k^T without an explicit transpose; bf16 operands, f32 accumulation.
    s = lax.dot_general(q, k, (((1,), (1,)), ((), ())),
                        preferred_element_type=jnp.float32)
    s = s * scale

    m_prev = m_sc[...]
    m_new = jnp.maximum(m_prev, jnp.max(s, axis=-1, keepdims=True))
    alpha = jnp.exp(m_prev - m_new)
    p = jnp.exp(s - m_new)

    l_sc[...] = alpha * l_sc[...] + jnp.sum(p, axis=-1, keepdims=True)
    acc_sc[...] = alpha * acc_sc[...] + jnp.dot(p.astype(v.dtype), v,
                                                preferred_element_type=jnp.float32)
    m_sc[...] = m_new

    @pl.when(ki == pl.num_programs(3) - 1)
    def _():
        # Exact f32 normalization (the approx EUP reciprocal caused the prior mismatch).
        o_ref[...] = (acc_sc[...] / l_sc[...]).astype(o_ref.dtype)
    # TODO(synk): add kv/q masking for ragged (non-tile-divisible) sequence lengths.


# ----------------------------- Wrappers -----------------------------------

def kan_linear(x2d, grid_t, inv_den, base_w_t, spline_w_flat, *,
               out_dtype=None, row_tile=512, out_tile=512):
    rows, in_f = x2d.shape
    out_f = base_w_t.shape[1]
    out_dtype = x2d.dtype if out_dtype is None else out_dtype

    # Row tile: largest multiple of 8 <= row_tile that divides rows (no jnp.pad copy).
    tm = min(row_tile, rows)
    tm = max(8, (tm // 8) * 8)
    while tm > 8 and rows % tm:
        tm -= 8
    if rows % tm:
        # Ragged row count: pad fallback.
        # TODO(synk): replace with a masked ragged last block to avoid the extra HBM copy.
        padded = pl.cdiv(rows, tm) * tm
        x2d = jnp.pad(x2d, ((0, padded - rows), (0, 0)))
    else:
        padded = rows

    # Output-feature tile keeps weight blocks small on v7x's 64 MiB VMEM.
    if out_f % out_tile == 0 and out_tile % 128 == 0:
        tn = out_tile
    else:
        tn = out_f

    # Explicit VMEM budget from the actual block/weight footprint (double-buffered).
    est = 2 * tm * in_f * x2d.dtype.itemsize
    est += 2 * tm * tn * jnp.dtype(out_dtype).itemsize
    est += 2 * (1 + NUM_BASIS) * in_f * tn * base_w_t.dtype.itemsize
    est += 2 * (NUM_GRID_PTS + SPLINE_ORDER * NUM_GRID_PTS) * in_f * 4
    est += (NUM_GRID_PTS + NUM_BASIS) * tm * in_f * 4     # in-kernel f32 temporaries
    vmem_limit = _clamp_vmem(2 * est)

    # Grid: out-feature tiles outer, row tiles inner -> weight blocks stay resident
    # across consecutive iterations.  Both axes are independent ("parallel").
    # TODO(synk): once pipeline_mode=pl.Buffered(1) is universally supported, use it
    # for the grid/inv_den/weight operands to drop their second pipeline buffer.
    out = pl.pallas_call(
        kan_linear_kernel,
        out_shape=jax.ShapeDtypeStruct((padded, out_f), out_dtype),
        grid=(out_f // tn, padded // tm),
        in_specs=[
            pl.BlockSpec((tm, in_f), lambda j, i: (i, 0)),
            pl.BlockSpec((NUM_GRID_PTS, in_f), lambda j, i: (0, 0)),
            pl.BlockSpec((SPLINE_ORDER * NUM_GRID_PTS, in_f), lambda j, i: (0, 0)),
            pl.BlockSpec((in_f, tn), lambda j, i: (0, j)),
            pl.BlockSpec((NUM_BASIS * in_f, tn), lambda j, i: (0, j)),
        ],
        out_specs=pl.BlockSpec((tm, tn), lambda j, i: (i, j)),
        compiler_params=pltpu.CompilerParams(
            dimension_semantics=("parallel", "parallel"),
            vmem_limit_bytes=vmem_limit),
    )(x2d, grid_t, inv_den, base_w_t, spline_w_flat)
    return out[:rows] if padded != rows else out


def sdpa(qkv5, heads, dim_heads, *, q_tile=256, kv_tile=256):
    """qkv5: (b, 3, heads, n, dh) -> (b, heads, n, dh) attention output."""
    b, three, h, n, dh = qkv5.shape
    assert three == 3 and h == heads and dh == dim_heads
    assert n % 8 == 0, "sequence length must be sublane-aligned"

    def pick_tile(t):
        t = min(t, n)
        t = max(8, (t // 8) * 8)
        while t > 8 and n % t:
            t -= 8
        return t

    tq = pick_tile(q_tile)
    tk = pick_tile(kv_tile)
    assert n % tq == 0 and n % tk == 0

    scale = 1.0 / math.sqrt(dim_heads)
    act_bytes = qkv5.dtype.itemsize
    est = 2 * (tq + 2 * tk) * dh * act_bytes       # q/k/v blocks (double buffered)
    est += 2 * tq * dh * act_bytes                 # out block
    est += tq * (dh + 2) * 4                       # m/l/acc scratch
    est += 3 * tq * tk * 4                         # scores / p temporaries
    vmem_limit = _clamp_vmem(2 * est)

    kern = functools.partial(flash_sdpa_kernel, scale=scale)
    # NOTE: per-head blocks are lane-sparse when dh < 128; acceptable since SDPA is
    # VPU/EUP-bound at small head dims (the kv reduction axis must stay innermost).
    return pl.pallas_call(
        kern,
        out_shape=jax.ShapeDtypeStruct((b, heads, n, dh), qkv5.dtype),
        grid=(b, heads, n // tq, n // tk),
        in_specs=[
            pl.BlockSpec((None, None, None, tq, dh),
                         lambda bi, hi, qi, ki: (bi, 0, hi, qi, 0)),
            pl.BlockSpec((None, None, None, tk, dh),
                         lambda bi, hi, qi, ki: (bi, 1, hi, ki, 0)),
            pl.BlockSpec((None, None, None, tk, dh),
                         lambda bi, hi, qi, ki: (bi, 2, hi, ki, 0)),
        ],
        out_specs=pl.BlockSpec((None, None, tq, dh),
                               lambda bi, hi, qi, ki: (bi, hi, qi, 0)),
        scratch_shapes=[
            pltpu.VMEM((tq, 1), jnp.float32),
            pltpu.VMEM((tq, 1), jnp.float32),
            pltpu.VMEM((tq, dh), jnp.float32),
        ],
        compiler_params=pltpu.CompilerParams(
            dimension_semantics=("parallel", "parallel", "parallel", "arbitrary"),
            vmem_limit_bytes=vmem_limit),
    )(qkv5, qkv5, qkv5)


def init_kan_params(key, in_f, out_f, param_dtype=jnp.bfloat16):
    """Deterministic synthetic init matching the parameter shapes of KANLinear."""
    k1, k2, k3 = jax.random.split(key, 3)
    bound = math.sqrt(6.0 / in_f)
    base_w = jax.random.uniform(k1, (out_f, in_f), jnp.float32, -bound, bound)
    spline_w = jax.random.uniform(k2, (out_f, in_f, NUM_BASIS), jnp.float32, -0.1, 0.1)
    spline_scaler = jax.random.uniform(k3, (out_f, in_f), jnp.float32, -bound, bound)

    h = 2.0 / GRID_SIZE
    grid_1d = (jnp.arange(-SPLINE_ORDER, GRID_SIZE + SPLINE_ORDER + 1,
                          dtype=jnp.float32) * h - 1.0)            # grid_range = [-1, 1]
    grid_t = jnp.tile(grid_1d[:, None], (1, in_f))                  # (12, in), f32

    # Precomputed reciprocal Cox-de Boor denominators: row (k-1)*NGP + j = 1/(g[j+k]-g[j]).
    inv_rows = []
    for k in range(1, SPLINE_ORDER + 1):
        for j in range(NUM_GRID_PTS):
            if j + k < NUM_GRID_PTS:
                inv_rows.append(1.0 / (grid_t[j + k] - grid_t[j]))
            else:
                inv_rows.append(jnp.zeros((in_f,), jnp.float32))
    inv_den = jnp.stack(inv_rows, axis=0)                           # (36, in), f32

    scaled_spline = spline_w * spline_scaler[..., None]             # (out, in, 8)
    # Basis-major flattening matching jnp.concatenate(bases, axis=1) in the kernel.
    spline_w_flat = jnp.transpose(scaled_spline, (2, 1, 0)).reshape(NUM_BASIS * in_f, out_f)
    return dict(grid_t=grid_t, inv_den=inv_den,
                base_w_t=base_w.T.astype(param_dtype),
                spline_w_flat=spline_w_flat.astype(param_dtype))


def init_attention_params(key, dim, heads, dim_heads, param_dtype=jnp.bfloat16):
    inner = heads * dim_heads
    k1, k2 = jax.random.split(key)
    return dict(
        toqkv=init_kan_params(k1, dim, inner * 3, param_dtype),
        to_out=init_kan_params(k2, inner, dim, param_dtype),
    )


def attention_forward(x, params, heads, dim_heads, *, interm_dtype=jnp.bfloat16):
    b, n, dim = x.shape
    inner = heads * dim_heads
    xf = x.reshape(b * n, dim)

    qkv = kan_linear(xf, **params["toqkv"], out_dtype=interm_dtype)   # (b*n, 3*inner) bf16
    # Free split of the last dim, then one XLA transpose so SDPA's BlockSpecs can
    # select (component, head) directly (no sub-128-lane slicing in-kernel).
    qkv5 = qkv.reshape(b, n, 3, heads, dim_heads)
    qkv5 = jnp.transpose(qkv5, (0, 2, 3, 1, 4))                       # (b, 3, h, n, dh)

    o = sdpa(qkv5, heads, dim_heads)                                  # (b, h, n, dh) bf16
    o = jnp.transpose(o, (0, 2, 1, 3)).reshape(b * n, inner)          # 'b h n d -> (b n) (h d)'

    out = kan_linear(o, **params["to_out"], out_dtype=x.dtype)        # (b*n, dim) f32
    # nn.Dropout(0.1) is the identity at inference time.
    return out.reshape(b, n, dim)


# ----------------------------- Pure-JAX reference --------------------------
# Mirrors the kernels' precision policy (bf16 MXU operands, f32 accumulation,
# bf16 inter-layer intermediates) so the comparison validates structure.

def kan_linear_ref(x2d, grid_t, inv_den, base_w_t, spline_w_flat):
    del inv_den
    in_f = x2d.shape[1]
    out_f = base_w_t.shape[1]
    x = x2d.astype(jnp.float32)
    silu = (x * jax.nn.sigmoid(x)).astype(base_w_t.dtype)
    out = jnp.dot(silu, base_w_t, preferred_element_type=jnp.float32)
    g = grid_t.T[None].astype(jnp.float32)             # (1, in, 12)
    xe = x[:, :, None]                                  # (N, in, 1)
    bases = jnp.logical_and(xe >= g[:, :, :-1], xe < g[:, :, 1:]).astype(jnp.float32)
    for k in range(1, SPLINE_ORDER + 1):
        bases = ((xe - g[:, :, :-(k + 1)]) /
                 (g[:, :, k:-1] - g[:, :, :-(k + 1)]) * bases[:, :, :-1]
                 + (g[:, :, k + 1:] - xe) /
                 (g[:, :, k + 1:] - g[:, :, 1:-k]) * bases[:, :, 1:])
    spline_w_t = spline_w_flat.reshape(NUM_BASIS, in_f, out_f)
    out = out + jnp.einsum("nik,kio->no", bases.astype(spline_w_flat.dtype), spline_w_t,
                           preferred_element_type=jnp.float32)
    return out


def attention_forward_ref(x, params, heads, dim_heads, *, interm_dtype=jnp.bfloat16):
    b, n, dim = x.shape
    inner = heads * dim_heads
    scale = 1.0 / math.sqrt(dim_heads)

    qkv = kan_linear_ref(x.reshape(b * n, dim), **params["toqkv"]).astype(interm_dtype)
    qkv = qkv.reshape(b, n, 3, heads, dim_heads)
    q, k, v = qkv[:, :, 0], qkv[:, :, 1], qkv[:, :, 2]                 # (b, n, h, dh)
    q, k, v = [jnp.transpose(t, (0, 2, 1, 3)) for t in (q, k, v)]      # (b, h, n, dh)

    s = jnp.einsum("bhqd,bhkd->bhqk", q, k, preferred_element_type=jnp.float32) * scale
    m = jnp.max(s, axis=-1, keepdims=True)
    p = jnp.exp(s - m)
    l = jnp.sum(p, axis=-1, keepdims=True)
    o = jnp.einsum("bhqk,bhkd->bhqd", p.astype(interm_dtype), v,
                   preferred_element_type=jnp.float32) / l
    o = o.astype(interm_dtype)
    o = jnp.transpose(o, (0, 2, 1, 3)).reshape(b * n, inner)

    out = kan_linear_ref(o, **params["to_out"])
    return out.reshape(b, n, dim).astype(x.dtype)


# ----------------------------- Main -----------------------------------------

if __name__ == "__main__":
    B, N, DIM = 2, 8, 32
    HEADS, DIM_HEADS = 2, 16

    key = jax.random.PRNGKey(0)
    kx, kp = jax.random.split(key)
    x = jax.random.normal(kx, (B, N, DIM), dtype=jnp.float32)
    params = init_attention_params(kp, DIM, HEADS, DIM_HEADS)

    out = attention_forward(x, params, HEADS, DIM_HEADS)
    out = jax.block_until_ready(out)

    ref = attention_forward_ref(x, params, HEADS, DIM_HEADS)
    assert out.shape == (B, N, DIM)
    assert out.dtype == x.dtype
    # Both paths use bf16 MXU operands with f32 accumulation; tolerance covers residual
    # bf16 rounding-boundary and accumulation-order differences between Mosaic and XLA.
    assert jnp.allclose(out, ref, atol=2e-2, rtol=2e-2), "mismatch vs. reference"

    print("KERNEL_OK")
</pallas_src>

<mosaic_0001>
module attributes {stable_mosaic.version = 11 : i64} {
  func.func @kan_linear_kernel(%arg0: i32, %arg1: i32, %arg2: memref<16x32xf32, #tpu.memory_space<vmem>>, %arg3: memref<12x32xf32, #tpu.memory_space<vmem>>, %arg4: memref<36x32xf32, #tpu.memory_space<vmem>>, %arg5: memref<32x96xbf16, #tpu.memory_space<vmem>>, %arg6: memref<256x96xbf16, #tpu.memory_space<vmem>>, %arg7: memref<16x96xbf16, #tpu.memory_space<vmem>>) attributes {dimension_semantics = [#tpu.dimension_semantics<parallel>, #tpu.dimension_semantics<parallel>], iteration_bounds = array<i64: 1, 1>, scalar_prefetch = 0 : i64, scratch_operands = 0 : i64, tpu.core_type = #tpu.core_type<tc>, window_params = [{transform_indices = @transform_0, window_bounds = array<i64: 16, 32>}, {pipeline_mode = #tpu.pipeline_mode<synchronous>, transform_indices = @transform_1, window_bounds = array<i64: 12, 32>}, {pipeline_mode = #tpu.pipeline_mode<synchronous>, transform_indices = @transform_2, window_bounds = array<i64: 36, 32>}, {transform_indices = @transform_3, window_bounds = array<i64: 32, 96>}, {transform_indices = @transform_4, window_bounds = array<i64: 256, 96>}, {transform_indices = @transform_5, window_bounds = array<i64: 16, 96>}]} {
    %c0 = arith.constant 0 : index
    %c0_0 = arith.constant 0 : index
    %0 = vector.load %arg2[%c0, %c0_0] : memref<16x32xf32, #tpu.memory_space<vmem>>, vector<16x32xf32>
    %c0_1 = arith.constant 0 : index
    %c0_2 = arith.constant 0 : index
    %1 = vector.load %arg3[%c0_1, %c0_2] : memref<12x32xf32, #tpu.memory_space<vmem>>, vector<1x32xf32>
    %c1 = arith.constant 1 : index
    %c0_3 = arith.constant 0 : index
    %2 = vector.load %arg3[%c1, %c0_3] : memref<12x32xf32, #tpu.memory_space<vmem>>, vector<1x32xf32>
    %c2 = arith.constant 2 : index
    %c0_4 = arith.constant 0 : index
    %3 = vector.load %arg3[%c2, %c0_4] : memref<12x32xf32, #tpu.memory_space<vmem>>, vector<1x32xf32>
    %c3 = arith.constant 3 : index
    %c0_5 = arith.constant 0 : index
    %4 = vector.load %arg3[%c3, %c0_5] : memref<12x32xf32, #tpu.memory_space<vmem>>, vector<1x32xf32>
    %c4 = arith.constant 4 : index
    %c0_6 = arith.constant 0 : index
    %5 = vector.load %arg3[%c4, %c0_6] : memref<12x32xf32, #tpu.memory_space<vmem>>, vector<1x32xf32>
    %c5 = arith.constant 5 : index
    %c0_7 = arith.constant 0 : index
    %6 = vector.load %arg3[%c5, %c0_7] : memref<12x32xf32, #tpu.memory_space<vmem>>, vector<1x32xf32>
    %c6 = arith.constant 6 : index
    %c0_8 = arith.constant 0 : index
    %7 = vector.load %arg3[%c6, %c0_8] : memref<12x32xf32, #tpu.memory_space<vmem>>, vector<1x32xf32>
    %c7 = arith.constant 7 : index
    %c0_9 = arith.constant 0 : index
    %8 = vector.load %arg3[%c7, %c0_9] : memref<12x32xf32, #tpu.memory_space<vmem>>, vector<1x32xf32>
    %c8 = arith.constant 8 : index
    %c0_10 = arith.constant 0 : index
    %9 = vector.load %arg3[%c8, %c0_10] : memref<12x32xf32, #tpu.memory_space<vmem>>, vector<1x32xf32>
    %c9 = arith.constant 9 : index
    %c0_11 = arith.constant 0 : index
    %10 = vector.load %arg3[%c9, %c0_11] : memref<12x32xf32, #tpu.memory_space<vmem>>, vector<1x32xf32>
    %c10 = arith.constant 10 : index
    %c0_12 = arith.constant 0 : index
    %11 = vector.load %arg3[%c10, %c0_12] : memref<12x32xf32, #tpu.memory_space<vmem>>, vector<1x32xf32>
    %c11 = arith.constant 11 : index
    %c0_13 = arith.constant 0 : index
    %12 = vector.load %arg3[%c11, %c0_13] : memref<12x32xf32, #tpu.memory_space<vmem>>, vector<1x32xf32>
    %13 = arith.negf %0 : vector<16x32xf32>
    %14 = math.exp %13 : vector<16x32xf32>
    %cst = arith.constant 1.000000e+00 : f32
    %15 = vector.broadcast %cst : f32 to vector<16x32xf32>
    %16 = arith.addf %15, %14 : vector<16x32xf32>
    %17 = arith.divf %15, %16 : vector<16x32xf32>
    %18 = arith.mulf %0, %17 : vector<16x32xf32>
    %19 = arith.truncf %18 : vector<16x32xf32> to vector<16x32xbf16>
    %c0_14 = arith.constant 0 : index
    %c0_15 = arith.constant 0 : index
    %20 = vector.load %arg5[%c0_14, %c0_15] : memref<32x96xbf16, #tpu.memory_space<vmem>>, vector<32x96xbf16>
    %cst_16 = arith.constant dense<0.000000e+00> : vector<16x96xf32>
    %21 = tpu.matmul %19, %20, %cst_16 {dimension_numbers = #tpu.dot_dimension_numbers<[1], [0], [0], [1], [0, 0, 1, 1], [], []>} : vector<16x32xbf16>, vector<32x96xbf16>, vector<16x96xf32> -> vector<16x96xf32>
    %22 = vector.broadcast %1 : vector<1x32xf32> to vector<16x32xf32>
    %23 = arith.cmpf oge, %0, %22 : vector<16x32xf32>
    %24 = vector.broadcast %2 : vector<1x32xf32> to vector<16x32xf32>
    %25 = arith.cmpf olt, %0, %24 : vector<16x32xf32>
    %26 = arith.andi %23, %25 : vector<16x32xi1>
    %cst_17 = arith.constant 1.000000e+00 : f32
    %cst_18 = arith.constant 0.000000e+00 : f32
    %27 = vector.broadcast %cst_17 : f32 to vector<16x32xf32>
    %28 = vector.broadcast %cst_18 : f32 to vector<16x32xf32>
    %29 = arith.select %26, %27, %28 : vector<16x32xi1>, vector<16x32xf32>
    %30 = vector.broadcast %2 : vector<1x32xf32> to vector<16x32xf32>
    %31 = arith.cmpf oge, %0, %30 : vector<16x32xf32>
    %32 = vector.broadcast %3 : vector<1x32xf32> to vector<16x32xf32>
    %33 = arith.cmpf olt, %0, %32 : vector<16x32xf32>
    %34 = arith.andi %31, %33 : vector<16x32xi1>
    %cst_19 = arith.constant 1.000000e+00 : f32
    %cst_20 = arith.constant 0.000000e+00 : f32
    %35 = vector.broadcast %cst_19 : f32 to vector<16x32xf32>
    %36 = vector.broadcast %cst_20 : f32 to vector<16x32xf32>
    %37 = arith.select %34, %35, %36 : vector<16x32xi1>, vector<16x32xf32>
    %38 = vector.broadcast %3 : vector<1x32xf32> to vector<16x32xf32>
    %39 = arith.cmpf oge, %0, %38 : vector<16x32xf32>
    %40 = vector.broadcast %4 : vector<1x32xf32> to vector<16x32xf32>
    %41 = arith.cmpf olt, %0, %40 : vector<16x32xf32>
    %42 = arith.andi %39, %41 : vector<16x32xi1>
    %cst_21 = arith.constant 1.000000e+00 : f32
    %cst_22 = arith.constant 0.000000e+00 : f32
    %43 = vector.broadcast %cst_21 : f32 to vector<16x32xf32>
    %44 = vector.broadcast %cst_22 : f32 to vector<16x32xf32>
    %45 = arith.select %42, %43, %44 : vector<16x32xi1>, vector<16x32xf32>
    %46 = vector.broadcast %4 : vector<1x32xf32> to vector<16x32xf32>
    %47 = arith.cmpf oge, %0, %46 : vector<16x32xf32>
    %48 = vector.broadcast %5 : vector<1x32xf32> to vector<16x32xf32>
    %49 = arith.cmpf olt, %0, %48 : vector<16x32xf32>
    %50 = arith.andi %47, %49 : vector<16x32xi1>
    %cst_23 = arith.constant 1.000000e+00 : f32
    %cst_24 = arith.constant 0.000000e+00 : f32
    %51 = vector.broadcast %cst_23 : f32 to vector<16x32xf32>
    %52 = vector.broadcast %cst_24 : f32 to vector<16x32xf32>
    %53 = arith.select %50, %51, %52 : vector<16x32xi1>, vector<16x32xf32>
    %54 = vector.broadcast %5 : vector<1x32xf32> to vector<16x32xf32>
    %55 = arith.cmpf oge, %0, %54 : vector<16x32xf32>
    %56 = vector.broadcast %6 : vector<1x32xf32> to vector<16x32xf32>
    %57 = arith.cmpf olt, %0, %56 : vector<16x32xf32>
    %58 = arith.andi %55, %57 : vector<16x32xi1>
    %cst_25 = arith.constant 1.000000e+00 : f32
    %cst_26 = arith.constant 0.000000e+00 : f32
    %59 = vector.broadcast %cst_25 : f32 to vector<16x32xf32>
    %60 = vector.broadcast %cst_26 : f32 to vector<16x32xf32>
    %61 = arith.select %58, %59, %60 : vector<16x32xi1>, vector<16x32xf32>
    %62 = vector.broadcast %6 : vector<1x32xf32> to vector<16x32xf32>
    %63 = arith.cmpf oge, %0, %62 : vector<16x32xf32>
    %64 = vector.broadcast %7 : vector<1x32xf32> to vector<16x32xf32>
    %65 = arith.cmpf olt, %0, %64 : vector<16x32xf32>
    %66 = arith.andi %63, %65 : vector<16x32xi1>
    %cst_27 = arith.constant 1.000000e+00 : f32
    %cst_28 = arith.constant 0.000000e+00 : f32
    %67 = vector.broadcast %cst_27 : f32 to vector<16x32xf32>
    %68 = vector.broadcast %cst_28 : f32 to vector<16x32xf32>
    %69 = arith.select %66, %67, %68 : vector<16x32xi1>, vector<16x32xf32>
    %70 = vector.broadcast %7 : vector<1x32xf32> to vector<16x32xf32>
    %71 = arith.cmpf oge, %0, %70 : vector<16x32xf32>
    %72 = vector.broadcast %8 : vector<1x32xf32> to vector<16x32xf32>
    %73 = arith.cmpf olt, %0, %72 : vector<16x32xf32>
    %74 = arith.andi %71, %73 : vector<16x32xi1>
    %cst_29 = arith.constant 1.000000e+00 : f32
    %cst_30 = arith.constant 0.000000e+00 : f32
    %75 = vector.broadcast %cst_29 : f32 to vector<16x32xf32>
    %76 = vector.broadcast %cst_30 : f32 to vector<16x32xf32>
    %77 = arith.select %74, %75, %76 : vector<16x32xi1>, vector<16x32xf32>
    %78 = vector.broadcast %8 : vector<1x32xf32> to vector<16x32xf32>
    %79 = arith.cmpf oge, %0, %78 : vector<16x32xf32>
    %80 = vector.broadcast %9 : vector<1x32xf32> to vector<16x32xf32>
    %81 = arith.cmpf olt, %0, %80 : vector<16x32xf32>
    %82 = arith.andi %79, %81 : vector<16x32xi1>
    %cst_31 = arith.constant 1.000000e+00 : f32
    %cst_32 = arith.constant 0.000000e+00 : f32
    %83 = vector.broadcast %cst_31 : f32 to vector<16x32xf32>
    %84 = vector.broadcast %cst_32 : f32 to vector<16x32xf32>
    %85 = arith.select %82, %83, %84 : vector<16x32xi1>, vector<16x32xf32>
    %86 = vector.broadcast %9 : vector<1x32xf32> to vector<16x32xf32>
    %87 = arith.cmpf oge, %0, %86 : vector<16x32xf32>
    %88 = vector.broadcast %10 : vector<1x32xf32> to vector<16x32xf32>
    %89 = arith.cmpf olt, %0, %88 : vector<16x32xf32>
    %90 = arith.andi %87, %89 : vector<16x32xi1>
    %cst_33 = arith.constant 1.000000e+00 : f32
    %cst_34 = arith.constant 0.000000e+00 : f32
    %91 = vector.broadcast %cst_33 : f32 to vector<16x32xf32>
    %92 = vector.broadcast %cst_34 : f32 to vector<16x32xf32>
    %93 = arith.select %90, %91, %92 : vector<16x32xi1>, vector<16x32xf32>
    %94 = vector.broadcast %10 : vector<1x32xf32> to vector<16x32xf32>
    %95 = arith.cmpf oge, %0, %94 : vector<16x32xf32>
    %96 = vector.broadcast %11 : vector<1x32xf32> to vector<16x32xf32>
    %97 = arith.cmpf olt, %0, %96 : vector<16x32xf32>
    %98 = arith.andi %95, %97 : vector<16x32xi1>
    %cst_35 = arith.constant 1.000000e+00 : f32
    %cst_36 = arith.constant 0.000000e+00 : f32
    %99 = vector.broadcast %cst_35 : f32 to vector<16x32xf32>
    %100 = vector.broadcast %cst_36 : f32 to vector<16x32xf32>
    %101 = arith.select %98, %99, %100 : vector<16x32xi1>, vector<16x32xf32>
    %102 = vector.broadcast %11 : vector<1x32xf32> to vector<16x32xf32>
    %103 = arith.cmpf oge, %0, %102 : vector<16x32xf32>
    %104 = vector.broadcast %12 : vector<1x32xf32> to vector<16x32xf32>
    %105 = arith.cmpf olt, %0, %104 : vector<16x32xf32>
    %106 = arith.andi %103, %105 : vector<16x32xi1>
    %cst_37 = arith.constant 1.000000e+00 : f32
    %cst_38 = arith.constant 0.000000e+00 : f32
    %107 = vector.broadcast %cst_37 : f32 to vector<16x32xf32>
    %108 = vector.broadcast %cst_38 : f32 to vector<16x32xf32>
    %109 = arith.select %106, %107, %108 : vector<16x32xi1>, vector<16x32xf32>
    %110 = vector.broadcast %1 : vector<1x32xf32> to vector<16x32xf32>
    %111 = arith.subf %0, %110 : vector<16x32xf32>
    %c0_39 = arith.constant 0 : index
    %c0_40 = arith.constant 0 : index
    %112 = vector.load %arg4[%c0_39, %c0_40] : memref<36x32xf32, #tpu.memory_space<vmem>>, vector<1x32xf32>
    %113 = vector.broadcast %112 : vector<1x32xf32> to vector<16x32xf32>
    %114 = arith.mulf %111, %113 : vector<16x32xf32>
    %115 = arith.mulf %114, %29 : vector<16x32xf32>
    %116 = vector.broadcast %3 : vector<1x32xf32> to vector<16x32xf32>
    %117 = arith.subf %116, %0 : vector<16x32xf32>
    %c1_41 = arith.constant 1 : index
    %c0_42 = arith.constant 0 : index
    %118 = vector.load %arg4[%c1_41, %c0_42] : memref<36x32xf32, #tpu.memory_space<vmem>>, vector<1x32xf32>
    %119 = vector.broadcast %118 : vector<1x32xf32> to vector<16x32xf32>
    %120 = arith.mulf %117, %119 : vector<16x32xf32>
    %121 = arith.mulf %120, %37 : vector<16x32xf32>
    %122 = arith.addf %115, %121 : vector<16x32xf32>
    %123 = vector.broadcast %2 : vector<1x32xf32> to vector<16x32xf32>
    %124 = arith.subf %0, %123 : vector<16x32xf32>
    %c1_43 = arith.constant 1 : index
    %c0_44 = arith.constant 0 : index
    %125 = vector.load %arg4[%c1_43, %c0_44] : memref<36x32xf32, #tpu.memory_space<vmem>>, vector<1x32xf32>
    %126 = vector.broadcast %125 : vector<1x32xf32> to vector<16x32xf32>
    %127 = arith.mulf %124, %126 : vector<16x32xf32>
    %128 = arith.mulf %127, %37 : vector<16x32xf32>
    %129 = vector.broadcast %4 : vector<1x32xf32> to vector<16x32xf32>
    %130 = arith.subf %129, %0 : vector<16x32xf32>
    %c2_45 = arith.constant 2 : index
    %c0_46 = arith.constant 0 : index
    %131 = vector.load %arg4[%c2_45, %c0_46] : memref<36x32xf32, #tpu.memory_space<vmem>>, vector<1x32xf32>
    %132 = vector.broadcast %131 : vector<1x32xf32> to vector<16x32xf32>
    %133 = arith.mulf %130, %132 : vector<16x32xf32>
    %134 = arith.mulf %133, %45 : vector<16x32xf32>
    %135 = arith.addf %128, %134 : vector<16x32xf32>
    %136 = vector.broadcast %3 : vector<1x32xf32> to vector<16x32xf32>
    %137 = arith.subf %0, %136 : vector<16x32xf32>
    %c2_47 = arith.constant 2 : index
    %c0_48 = arith.constant 0 : index
    %138 = vector.load %arg4[%c2_47, %c0_48] : memref<36x32xf32, #tpu.memory_space<vmem>>, vector<1x32xf32>
    %139 = vector.broadcast %138 : vector<1x32xf32> to vector<16x32xf32>
    %140 = arith.mulf %137, %139 : vector<16x32xf32>
    %141 = arith.mulf %140, %45 : vector<16x32xf32>
    %142 = vector.broadcast %5 : vector<1x32xf32> to vector<16x32xf32>
    %143 = arith.subf %142, %0 : vector<16x32xf32>
    %c3_49 = arith.constant 3 : index
    %c0_50 = arith.constant 0 : index
    %144 = vector.load %arg4[%c3_49, %c0_50] : memref<36x32xf32, #tpu.memory_space<vmem>>, vector<1x32xf32>
    %145 = vector.broadcast %144 : vector<1x32xf32> to vector<16x32xf32>
    %146 = arith.mulf %143, %145 : vector<16x32xf32>
    %147 = arith.mulf %146, %53 : vector<16x32xf32>
    %148 = arith.addf %141, %147 : vector<16x32xf32>
    %149 = vector.broadcast %4 : vector<1x32xf32> to vector<16x32xf32>
    %150 = arith.subf %0, %149 : vector<16x32xf32>
    %c3_51 = arith.constant 3 : index
    %c0_52 = arith.constant 0 : index
    %151 = vector.load %arg4[%c3_51, %c0_52] : memref<36x32xf32, #tpu.memory_space<vmem>>, vector<1x32xf32>
    %152 = vector.broadcast %151 : vector<1x32xf32> to vector<16x32xf32>
    %153 = arith.mulf %150, %152 : vector<16x32xf32>
    %154 = arith.mulf %153, %53 : vector<16x32xf32>
    %155 = vector.broadcast %6 : vector<1x32xf32> to vector<16x32xf32>
    %156 = arith.subf %155, %0 : vector<16x32xf32>
    %c4_53 = arith.constant 4 : index
    %c0_54 = arith.constant 0 : index
    %157 = vector.load %arg4[%c4_53, %c0_54] : memref<36x32xf32, #tpu.memory_space<vmem>>, vector<1x32xf32>
    %158 = vector.broadcast %157 : vector<1x32xf32> to vector<16x32xf32>
    %159 = arith.mulf %156, %158 : vector<16x32xf32>
    %160 = arith.mulf %159, %61 : vector<16x32xf32>
    %161 = arith.addf %154, %160 : vector<16x32xf32>
    %162 = vector.broadcast %5 : vector<1x32xf32> to vector<16x32xf32>
    %163 = arith.subf %0, %162 : vector<16x32xf32>
    %c4_55 = arith.constant 4 : index
    %c0_56 = arith.constant 0 : index
    %164 = vector.load %arg4[%c4_55, %c0_56] : memref<36x32xf32, #tpu.memory_space<vmem>>, vector<1x32xf32>
    %165 = vector.broadcast %164 : vector<1x32xf32> to vector<16x32xf32>
    %166 = arith.mulf %163, %165 : vector<16x32xf32>
    %167 = arith.mulf %166, %61 : vector<16x32xf32>
    %168 = vector.broadcast %7 : vector<1x32xf32> to vector<16x32xf32>
    %169 = arith.subf %168, %0 : vector<16x32xf32>
    %c5_57 = arith.constant 5 : index
    %c0_58 = arith.constant 0 : index
    %170 = vector.load %arg4[%c5_57, %c0_58] : memref<36x32xf32, #tpu.memory_space<vmem>>, vector<1x32xf32>
    %171 = vector.broadcast %170 : vector<1x32xf32> to vector<16x32xf32>
    %172 = arith.mulf %169, %171 : vector<16x32xf32>
    %173 = arith.mulf %172, %69 : vector<16x32xf32>
    %174 = arith.addf %167, %173 : vector<16x32xf32>
    %175 = vector.broadcast %6 : vector<1x32xf32> to vector<16x32xf32>
    %176 = arith.subf %0, %175 : vector<16x32xf32>
    %c5_59 = arith.constant 5 : index
    %c0_60 = arith.constant 0 : index
    %177 = vector.load %arg4[%c5_59, %c0_60] : memref<36x32xf32, #tpu.memory_space<vmem>>, vector<1x32xf32>
    %178 = vector.broadcast %177 : vector<1x32xf32> to vector<16x32xf32>
    %179 = arith.mulf %176, %178 : vector<16x32xf32>
    %180 = arith.mulf %179, %69 : vector<16x32xf32>
    %181 = vector.broadcast %8 : vector<1x32xf32> to vector<16x32xf32>
    %182 = arith.subf %181, %0 : vector<16x32xf32>
    %c6_61 = arith.constant 6 : index
    %c0_62 = arith.constant 0 : index
    %183 = vector.load %arg4[%c6_61, %c0_62] : memref<36x32xf32, #tpu.memory_space<vmem>>, vector<1x32xf32>
    %184 = vector.broadcast %183 : vector<1x32xf32> to vector<16x32xf32>
    %185 = arith.mulf %182, %184 : vector<16x32xf32>
    %186 = arith.mulf %185, %77 : vector<16x32xf32>
    %187 = arith.addf %180, %186 : vector<16x32xf32>
    %188 = vector.broadcast %7 : vector<1x32xf32> to vector<16x32xf32>
    %189 = arith.subf %0, %188 : vector<16x32xf32>
    %c6_63 = arith.constant 6 : index
    %c0_64 = arith.constant 0 : index
    %190 = vector.load %arg4[%c6_63, %c0_64] : memref<36x32xf32, #tpu.memory_space<vmem>>, vector<1x32xf32>
    %191 = vector.broadcast %190 : vector<1x32xf32> to vector<16x32xf32>
    %192 = arith.mulf %189, %191 : vector<16x32xf32>
    %193 = arith.mulf %192, %77 : vector<16x32xf32>
    %194 = vector.broadcast %9 : vector<1x32xf32> to vector<16x32xf32>
    %195 = arith.subf %194, %0 : vector<16x32xf32>
    %c7_65 = arith.constant 7 : index
    %c0_66 = arith.constant 0 : index
    %196 = vector.load %arg4[%c7_65, %c0_66] : memref<36x32xf32, #tpu.memory_space<vmem>>, vector<1x32xf32>
    %197 = vector.broadcast %196 : vector<1x32xf32> to vector<16x32xf32>
    %198 = arith.mulf %195, %197 : vector<16x32xf32>
    %199 = arith.mulf %198, %85 : vector<16x32xf32>
    %200 = arith.addf %193, %199 : vector<16x32xf32>
    %201 = vector.broadcast %8 : vector<1x32xf32> to vector<16x32xf32>
    %202 = arith.subf %0, %201 : vector<16x32xf32>
    %c7_67 = arith.constant 7 : index
    %c0_68 = arith.constant 0 : index
    %203 = vector.load %arg4[%c7_67, %c0_68] : memref<36x32xf32, #tpu.memory_space<vmem>>, vector<1x32xf32>
    %204 = vector.broadcast %203 : vector<1x32xf32> to vector<16x32xf32>
    %205 = arith.mulf %202, %204 : vector<16x32xf32>
    %206 = arith.mulf %205, %85 : vector<16x32xf32>
    %207 = vector.broadcast %10 : vector<1x32xf32> to vector<16x32xf32>
    %208 = arith.subf %207, %0 : vector<16x32xf32>
    %c8_69 = arith.constant 8 : index
    %c0_70 = arith.constant 0 : index
    %209 = vector.load %arg4[%c8_69, %c0_70] : memref<36x32xf32, #tpu.memory_space<vmem>>, vector<1x32xf32>
    %210 = vector.broadcast %209 : vector<1x32xf32> to vector<16x32xf32>
    %211 = arith.mulf %208, %210 : vector<16x32xf32>
    %212 = arith.mulf %211, %93 : vector<16x32xf32>
    %213 = arith.addf %206, %212 : vector<16x32xf32>
    %214 = vector.broadcast %9 : vector<1x32xf32> to vector<16x32xf32>
    %215 = arith.subf %0, %214 : vector<16x32xf32>
    %c8_71 = arith.constant 8 : index
    %c0_72 = arith.constant 0 : index
    %216 = vector.load %arg4[%c8_71, %c0_72] : memref<36x32xf32, #tpu.memory_space<vmem>>, vector<1x32xf32>
    %217 = vector.broadcast %216 : vector<1x32xf32> to vector<16x32xf32>
    %218 = arith.mulf %215, %217 : vector<16x32xf32>
    %219 = arith.mulf %218, %93 : vector<16x32xf32>
    %220 = vector.broadcast %11 : vector<1x32xf32> to vector<16x32xf32>
    %221 = arith.subf %220, %0 : vector<16x32xf32>
    %c9_73 = arith.constant 9 : index
    %c0_74 = arith.constant 0 : index
    %222 = vector.load %arg4[%c9_73, %c0_74] : memref<36x32xf32, #tpu.memory_space<vmem>>, vector<1x32xf32>
    %223 = vector.broadcast %222 : vector<1x32xf32> to vector<16x32xf32>
    %224 = arith.mulf %221, %223 : vector<16x32xf32>
    %225 = arith.mulf %224, %101 : vector<16x32xf32>
    %226 = arith.addf %219, %225 : vector<16x32xf32>
    %227 = vector.broadcast %10 : vector<1x32xf32> to vector<16x32xf32>
    %228 = arith.subf %0, %227 : vector<16x32xf32>
    %c9_75 = arith.constant 9 : index
    %c0_76 = arith.constant 0 : index
    %229 = vector.load %arg4[%c9_75, %c0_76] : memref<36x32xf32, #tpu.memory_space<vmem>>, vector<1x32xf32>
    %230 = vector.broadcast %229 : vector<1x32xf32> to vector<16x32xf32>
    %231 = arith.mulf %228, %230 : vector<16x32xf32>
    %232 = arith.mulf %231, %101 : vector<16x32xf32>
    %233 = vector.broadcast %12 : vector<1x32xf32> to vector<16x32xf32>
    %234 = arith.subf %233, %0 : vector<16x32xf32>
    %c10_77 = arith.constant 10 : index
    %c0_78 = arith.constant 0 : index
    %235 = vector.load %arg4[%c10_77, %c0_78] : memref<36x32xf32, #tpu.memory_space<vmem>>, vector<1x32xf32>
    %236 = vector.broadcast %235 : vector<1x32xf32> to vector<16x32xf32>
    %237 = arith.mulf %234, %236 : vector<16x32xf32>
    %238 = arith.mulf %237, %109 : vector<16x32xf32>
    %239 = arith.addf %232, %238 : vector<16x32xf32>
    %240 = vector.broadcast %1 : vector<1x32xf32> to vector<16x32xf32>
    %241 = arith.subf %0, %240 : vector<16x32xf32>
    %c12 = arith.constant 12 : index
    %c0_79 = arith.constant 0 : index
    %242 = vector.load %arg4[%c12, %c0_79] : memref<36x32xf32, #tpu.memory_space<vmem>>, vector<1x32xf32>
    %243 = vector.broadcast %242 : vector<1x32xf32> to vector<16x32xf32>
    %244 = arith.mulf %241, %243 : vector<16x32xf32>
    %245 = arith.mulf %244, %122 : vector<16x32xf32>
    %246 = vector.broadcast %4 : vector<1x32xf32> to vector<16x32xf32>
    %247 = arith.subf %246, %0 : vector<16x32xf32>
    %c13 = arith.constant 13 : index
    %c0_80 = arith.constant 0 : index
    %248 = vector.load %arg4[%c13, %c0_80] : memref<36x32xf32, #tpu.memory_space<vmem>>, vector<1x32xf32>
    %249 = vector.broadcast %248 : vector<1x32xf32> to vector<16x32xf32>
    %250 = arith.mulf %247, %249 : vector<16x32xf32>
    %251 = arith.mulf %250, %135 : vector<16x32xf32>
    %252 = arith.addf %245, %251 : vector<16x32xf32>
    %253 = vector.broadcast %2 : vector<1x32xf32> to vector<16x32xf32>
    %254 = arith.subf %0, %253 : vector<16x32xf32>
    %c13_81 = arith.constant 13 : index
    %c0_82 = arith.constant 0 : index
    %255 = vector.load %arg4[%c13_81, %c0_82] : memref<36x32xf32, #tpu.memory_space<vmem>>, vector<1x32xf32>
    %256 = vector.broadcast %255 : vector<1x32xf32> to vector<16x32xf32>
    %257 = arith.mulf %254, %256 : vector<16x32xf32>
    %258 = arith.mulf %257, %135 : vector<16x32xf32>
    %259 = vector.broadcast %5 : vector<1x32xf32> to vector<16x32xf32>
    %260 = arith.subf %259, %0 : vector<16x32xf32>
    %c14 = arith.constant 14 : index
    %c0_83 = arith.constant 0 : index
    %261 = vector.load %arg4[%c14, %c0_83] : memref<36x32xf32, #tpu.memory_space<vmem>>, vector<1x32xf32>
    %262 = vector.broadcast %261 : vector<1x32xf32> to vector<16x32xf32>
    %263 = arith.mulf %260, %262 : vector<16x32xf32>
    %264 = arith.mulf %263, %148 : vector<16x32xf32>
    %265 = arith.addf %258, %264 : vector<16x32xf32>
    %266 = vector.broadcast %3 : vector<1x32xf32> to vector<16x32xf32>
    %267 = arith.subf %0, %266 : vector<16x32xf32>
    %c14_84 = arith.constant 14 : index
    %c0_85 = arith.constant 0 : index
    %268 = vector.load %arg4[%c14_84, %c0_85] : memref<36x32xf32, #tpu.memory_space<vmem>>, vector<1x32xf32>
    %269 = vector.broadcast %268 : vector<1x32xf32> to vector<16x32xf32>
    %270 = arith.mulf %267, %269 : vector<16x32xf32>
    %271 = arith.mulf %270, %148 : vector<16x32xf32>
    %272 = vector.broadcast %6 : vector<1x32xf32> to vector<16x32xf32>
    %273 = arith.subf %272, %0 : vector<16x32xf32>
    %c15 = arith.constant 15 : index
    %c0_86 = arith.constant 0 : index
    %274 = vector.load %arg4[%c15, %c0_86] : memref<36x32xf32, #tpu.memory_space<vmem>>, vector<1x32xf32>
    %275 = vector.broadcast %274 : vector<1x32xf32> to vector<16x32xf32>
    %276 = arith.mulf %273, %275 : vector<16x32xf32>
    %277 = arith.mulf %276, %161 : vector<16x32xf32>
    %278 = arith.addf %271, %277 : vector<16x32xf32>
    %279 = vector.broadcast %4 : vector<1x32xf32> to vector<16x32xf32>
    %280 = arith.subf %0, %279 : vector<16x32xf32>
    %c15_87 = arith.constant 15 : index
    %c0_88 = arith.constant 0 : index
    %281 = vector.load %arg4[%c15_87, %c0_88] : memref<36x32xf32, #tpu.memory_space<vmem>>, vector<1x32xf32>
    %282 = vector.broadcast %281 : vector<1x32xf32> to vector<16x32xf32>
    %283 = arith.mulf %280, %282 : vector<16x32xf32>
    %284 = arith.mulf %283, %161 : vector<16x32xf32>
    %285 = vector.broadcast %7 : vector<1x32xf32> to vector<16x32xf32>
    %286 = arith.subf %285, %0 : vector<16x32xf32>
    %c16 = arith.constant 16 : index
    %c0_89 = arith.constant 0 : index
    %287 = vector.load %arg4[%c16, %c0_89] : memref<36x32xf32, #tpu.memory_space<vmem>>, vector<1x32xf32>
    %288 = vector.broadcast %287 : vector<1x32xf32> to vector<16x32xf32>
    %289 = arith.mulf %286, %288 : vector<16x32xf32>
    %290 = arith.mulf %289, %174 : vector<16x32xf32>
    %291 = arith.addf %284, %290 : vector<16x32xf32>
    %292 = vector.broadcast %5 : vector<1x32xf32> to vector<16x32xf32>
    %293 = arith.subf %0, %292 : vector<16x32xf32>
    %c16_90 = arith.constant 16 : index
    %c0_91 = arith.constant 0 : index
    %294 = vector.load %arg4[%c16_90, %c0_91] : memref<36x32xf32, #tpu.memory_space<vmem>>, vector<1x32xf32>
    %295 = vector.broadcast %294 : vector<1x32xf32> to vector<16x32xf32>
    %296 = arith.mulf %293, %295 : vector<16x32xf32>
    %297 = arith.mulf %296, %174 : vector<16x32xf32>
    %298 = vector.broadcast %8 : vector<1x32xf32> to vector<16x32xf32>
    %299 = arith.subf %298, %0 : vector<16x32xf32>
    %c17 = arith.constant 17 : index
    %c0_92 = arith.constant 0 : index
    %300 = vector.load %arg4[%c17, %c0_92] : memref<36x32xf32, #tpu.memory_space<vmem>>, vector<1x32xf32>
    %301 = vector.broadcast %300 : vector<1x32xf32> to vector<16x32xf32>
    %302 = arith.mulf %299, %301 : vector<16x32xf32>
    %303 = arith.mulf %302, %187 : vector<16x32xf32>
    %304 = arith.addf %297, %303 : vector<16x32xf32>
    %305 = vector.broadcast %6 : vector<1x32xf32> to vector<16x32xf32>
    %306 = arith.subf %0, %305 : vector<16x32xf32>
    %c17_93 = arith.constant 17 : index
    %c0_94 = arith.constant 0 : index
    %307 = vector.load %arg4[%c17_93, %c0_94] : memref<36x32xf32, #tpu.memory_space<vmem>>, vector<1x32xf32>
    %308 = vector.broadcast %307 : vector<1x32xf32> to vector<16x32xf32>
    %309 = arith.mulf %306, %308 : vector<16x32xf32>
    %310 = arith.mulf %309, %187 : vector<16x32xf32>
    %311 = vector.broadcast %9 : vector<1x32xf32> to vector<16x32xf32>
    %312 = arith.subf %311, %0 : vector<16x32xf32>
    %c18 = arith.constant 18 : index
    %c0_95 = arith.constant 0 : index
    %313 = vector.load %arg4[%c18, %c0_95] : memref<36x32xf32, #tpu.memory_space<vmem>>, vector<1x32xf32>
    %314 = vector.broadcast %313 : vector<1x32xf32> to vector<16x32xf32>
    %315 = arith.mulf %312, %314 : vector<16x32xf32>
    %316 = arith.mulf %315, %200 : vector<16x32xf32>
    %317 = arith.addf %310, %316 : vector<16x32xf32>
    %318 = vector.broadcast %7 : vector<1x32xf32> to vector<16x32xf32>
    %319 = arith.subf %0, %318 : vector<16x32xf32>
    %c18_96 = arith.constant 18 : index
    %c0_97 = arith.constant 0 : index
    %320 = vector.load %arg4[%c18_96, %c0_97] : memref<36x32xf32, #tpu.memory_space<vmem>>, vector<1x32xf32>
    %321 = vector.broadcast %320 : vector<1x32xf32> to vector<16x32xf32>
    %322 = arith.mulf %319, %321 : vector<16x32xf32>
    %323 = arith.mulf %322, %200 : vector<16x32xf32>
    %324 = vector.broadcast %10 : vector<1x32xf32> to vector<16x32xf32>
    %325 = arith.subf %324, %0 : vector<16x32xf32>
    %c19 = arith.constant 19 : index
    %c0_98 = arith.constant 0 : index
    %326 = vector.load %arg4[%c19, %c0_98] : memref<36x32xf32, #tpu.memory_space<vmem>>, vector<1x32xf32>
    %327 = vector.broadcast %326 : vector<1x32xf32> to vector<16x32xf32>
    %328 = arith.mulf %325, %327 : vector<16x32xf32>
    %329 = arith.mulf %328, %213 : vector<16x32xf32>
    %330 = arith.addf %323, %329 : vector<16x32xf32>
    %331 = vector.broadcast %8 : vector<1x32xf32> to vector<16x32xf32>
    %332 = arith.subf %0, %331 : vector<16x32xf32>
    %c19_99 = arith.constant 19 : index
    %c0_100 = arith.constant 0 : index
    %333 = vector.load %arg4[%c19_99, %c0_100] : memref<36x32xf32, #tpu.memory_space<vmem>>, vector<1x32xf32>
    %334 = vector.broadcast %333 : vector<1x32xf32> to vector<16x32xf32>
    %335 = arith.mulf %332, %334 : vector<16x32xf32>
    %336 = arith.mulf %335, %213 : vector<16x32xf32>
    %337 = vector.broadcast %11 : vector<1x32xf32> to vector<16x32xf32>
    %338 = arith.subf %337, %0 : vector<16x32xf32>
    %c20 = arith.constant 20 : index
    %c0_101 = arith.constant 0 : index
    %339 = vector.load %arg4[%c20, %c0_101] : memref<36x32xf32, #tpu.memory_space<vmem>>, vector<1x32xf32>
    %340 = vector.broadcast %339 : vector<1x32xf32> to vector<16x32xf32>
    %341 = arith.mulf %338, %340 : vector<16x32xf32>
    %342 = arith.mulf %341, %226 : vector<16x32xf32>
    %343 = arith.addf %336, %342 : vector<16x32xf32>
    %344 = vector.broadcast %9 : vector<1x32xf32> to vector<16x32xf32>
    %345 = arith.subf %0, %344 : vector<16x32xf32>
    %c20_102 = arith.constant 20 : index
    %c0_103 = arith.constant 0 : index
    %346 = vector.load %arg4[%c20_102, %c0_103] : memref<36x32xf32, #tpu.memory_space<vmem>>, vector<1x32xf32>
    %347 = vector.broadcast %346 : vector<1x32xf32> to vector<16x32xf32>
    %348 = arith.mulf %345, %347 : vector<16x32xf32>
    %349 = arith.mulf %348, %226 : vector<16x32xf32>
    %350 = vector.broadcast %12 : vector<1x32xf32> to vector<16x32xf32>
    %351 = arith.subf %350, %0 : vector<16x32xf32>
    %c21 = arith.constant 21 : index
    %c0_104 = arith.constant 0 : index
    %352 = vector.load %arg4[%c21, %c0_104] : memref<36x32xf32, #tpu.memory_space<vmem>>, vector<1x32xf32>
    %353 = vector.broadcast %352 : vector<1x32xf32> to vector<16x32xf32>
    %354 = arith.mulf %351, %353 : vector<16x32xf32>
    %355 = arith.mulf %354, %239 : vector<16x32xf32>
    %356 = arith.addf %349, %355 : vector<16x32xf32>
    %357 = vector.broadcast %1 : vector<1x32xf32> to vector<16x32xf32>
    %358 = arith.subf %0, %357 : vector<16x32xf32>
    %c24 = arith.constant 24 : index
    %c0_105 = arith.constant 0 : index
    %359 = vector.load %arg4[%c24, %c0_105] : memref<36x32xf32, #tpu.memory_space<vmem>>, vector<1x32xf32>
    %360 = vector.broadcast %359 : vector<1x32xf32> to vector<16x32xf32>
    %361 = arith.mulf %358, %360 : vector<16x32xf32>
    %362 = arith.mulf %361, %252 : vector<16x32xf32>
    %363 = vector.broadcast %5 : vector<1x32xf32> to vector<16x32xf32>
    %364 = arith.subf %363, %0 : vector<16x32xf32>
    %c25 = arith.constant 25 : index
    %c0_106 = arith.constant 0 : index
    %365 = vector.load %arg4[%c25, %c0_106] : memref<36x32xf32, #tpu.memory_space<vmem>>, vector<1x32xf32>
    %366 = vector.broadcast %365 : vector<1x32xf32> to vector<16x32xf32>
    %367 = arith.mulf %364, %366 : vector<16x32xf32>
    %368 = arith.mulf %367, %265 : vector<16x32xf32>
    %369 = arith.addf %362, %368 : vector<16x32xf32>
    %370 = vector.broadcast %2 : vector<1x32xf32> to vector<16x32xf32>
    %371 = arith.subf %0, %370 : vector<16x32xf32>
    %c25_107 = arith.constant 25 : index
    %c0_108 = arith.constant 0 : index
    %372 = vector.load %arg4[%c25_107, %c0_108] : memref<36x32xf32, #tpu.memory_space<vmem>>, vector<1x32xf32>
    %373 = vector.broadcast %372 : vector<1x32xf32> to vector<16x32xf32>
    %374 = arith.mulf %371, %373 : vector<16x32xf32>
    %375 = arith.mulf %374, %265 : vector<16x32xf32>
    %376 = vector.broadcast %6 : vector<1x32xf32> to vector<16x32xf32>
    %377 = arith.subf %376, %0 : vector<16x32xf32>
    %c26 = arith.constant 26 : index
    %c0_109 = arith.constant 0 : index
    %378 = vector.load %arg4[%c26, %c0_109] : memref<36x32xf32, #tpu.memory_space<vmem>>, vector<1x32xf32>
    %379 = vector.broadcast %378 : vector<1x32xf32> to vector<16x32xf32>
    %380 = arith.mulf %377, %379 : vector<16x32xf32>
    %381 = arith.mulf %380, %278 : vector<16x32xf32>
    %382 = arith.addf %375, %381 : vector<16x32xf32>
    %383 = vector.broadcast %3 : vector<1x32xf32> to vector<16x32xf32>
    %384 = arith.subf %0, %383 : vector<16x32xf32>
    %c26_110 = arith.constant 26 : index
    %c0_111 = arith.constant 0 : index
    %385 = vector.load %arg4[%c26_110, %c0_111] : memref<36x32xf32, #tpu.memory_space<vmem>>, vector<1x32xf32>
    %386 = vector.broadcast %385 : vector<1x32xf32> to vector<16x32xf32>
    %387 = arith.mulf %384, %386 : vector<16x32xf32>
    %388 = arith.mulf %387, %278 : vector<16x32xf32>
    %389 = vector.broadcast %7 : vector<1x32xf32> to vector<16x32xf32>
    %390 = arith.subf %389, %0 : vector<16x32xf32>
    %c27 = arith.constant 27 : index
    %c0_112 = arith.constant 0 : index
    %391 = vector.load %arg4[%c27, %c0_112] : memref<36x32xf32, #tpu.memory_space<vmem>>, vector<1x32xf32>
    %392 = vector.broadcast %391 : vector<1x32xf32> to vector<16x32xf32>
    %393 = arith.mulf %390, %392 : vector<16x32xf32>
    %394 = arith.mulf %393, %291 : vector<16x32xf32>
    %395 = arith.addf %388, %394 : vector<16x32xf32>
    %396 = vector.broadcast %4 : vector<1x32xf32> to vector<16x32xf32>
    %397 = arith.subf %0, %396 : vector<16x32xf32>
    %c27_113 = arith.constant 27 : index
    %c0_114 = arith.constant 0 : index
    %398 = vector.load %arg4[%c27_113, %c0_114] : memref<36x32xf32, #tpu.memory_space<vmem>>, vector<1x32xf32>
    %399 = vector.broadcast %398 : vector<1x32xf32> to vector<16x32xf32>
    %400 = arith.mulf %397, %399 : vector<16x32xf32>
    %401 = arith.mulf %400, %291 : vector<16x32xf32>
    %402 = vector.broadcast %8 : vector<1x32xf32> to vector<16x32xf32>
    %403 = arith.subf %402, %0 : vector<16x32xf32>
    %c28 = arith.constant 28 : index
    %c0_115 = arith.constant 0 : index
    %404 = vector.load %arg4[%c28, %c0_115] : memref<36x32xf32, #tpu.memory_space<vmem>>, vector<1x32xf32>
    %405 = vector.broadcast %404 : vector<1x32xf32> to vector<16x32xf32>
    %406 = arith.mulf %403, %405 : vector<16x32xf32>
    %407 = arith.mulf %406, %304 : vector<16x32xf32>
    %408 = arith.addf %401, %407 : vector<16x32xf32>
    %409 = vector.broadcast %5 : vector<1x32xf32> to vector<16x32xf32>
    %410 = arith.subf %0, %409 : vector<16x32xf32>
    %c28_116 = arith.constant 28 : index
    %c0_117 = arith.constant 0 : index
    %411 = vector.load %arg4[%c28_116, %c0_117] : memref<36x32xf32, #tpu.memory_space<vmem>>, vector<1x32xf32>
    %412 = vector.broadcast %411 : vector<1x32xf32> to vector<16x32xf32>
    %413 = arith.mulf %410, %412 : vector<16x32xf32>
    %414 = arith.mulf %413, %304 : vector<16x32xf32>
    %415 = vector.broadcast %9 : vector<1x32xf32> to vector<16x32xf32>
    %416 = arith.subf %415, %0 : vector<16x32xf32>
    %c29 = arith.constant 29 : index
    %c0_118 = arith.constant 0 : index
    %417 = vector.load %arg4[%c29, %c0_118] : memref<36x32xf32, #tpu.memory_space<vmem>>, vector<1x32xf32>
    %418 = vector.broadcast %417 : vector<1x32xf32> to vector<16x32xf32>
    %419 = arith.mulf %416, %418 : vector<16x32xf32>
    %420 = arith.mulf %419, %317 : vector<16x32xf32>
    %421 = arith.addf %414, %420 : vector<16x32xf32>
    %422 = vector.broadcast %6 : vector<1x32xf32> to vector<16x32xf32>
    %423 = arith.subf %0, %422 : vector<16x32xf32>
    %c29_119 = arith.constant 29 : index
    %c0_120 = arith.constant 0 : index
    %424 = vector.load %arg4[%c29_119, %c0_120] : memref<36x32xf32, #tpu.memory_space<vmem>>, vector<1x32xf32>
    %425 = vector.broadcast %424 : vector<1x32xf32> to vector<16x32xf32>
    %426 = arith.mulf %423, %425 : vector<16x32xf32>
    %427 = arith.mulf %426, %317 : vector<16x32xf32>
    %428 = vector.broadcast %10 : vector<1x32xf32> to vector<16x32xf32>
    %429 = arith.subf %428, %0 : vector<16x32xf32>
    %c30 = arith.constant 30 : index
    %c0_121 = arith.constant 0 : index
    %430 = vector.load %arg4[%c30, %c0_121] : memref<36x32xf32, #tpu.memory_space<vmem>>, vector<1x32xf32>
    %431 = vector.broadcast %430 : vector<1x32xf32> to vector<16x32xf32>
    %432 = arith.mulf %429, %431 : vector<16x32xf32>
    %433 = arith.mulf %432, %330 : vector<16x32xf32>
    %434 = arith.addf %427, %433 : vector<16x32xf32>
    %435 = vector.broadcast %7 : vector<1x32xf32> to vector<16x32xf32>
    %436 = arith.subf %0, %435 : vector<16x32xf32>
    %c30_122 = arith.constant 30 : index
    %c0_123 = arith.constant 0 : index
    %437 = vector.load %arg4[%c30_122, %c0_123] : memref<36x32xf32, #tpu.memory_space<vmem>>, vector<1x32xf32>
    %438 = vector.broadcast %437 : vector<1x32xf32> to vector<16x32xf32>
    %439 = arith.mulf %436, %438 : vector<16x32xf32>
    %440 = arith.mulf %439, %330 : vector<16x32xf32>
    %441 = vector.broadcast %11 : vector<1x32xf32> to vector<16x32xf32>
    %442 = arith.subf %441, %0 : vector<16x32xf32>
    %c31 = arith.constant 31 : index
    %c0_124 = arith.constant 0 : index
    %443 = vector.load %arg4[%c31, %c0_124] : memref<36x32xf32, #tpu.memory_space<vmem>>, vector<1x32xf32>
    %444 = vector.broadcast %443 : vector<1x32xf32> to vector<16x32xf32>
    %445 = arith.mulf %442, %444 : vector<16x32xf32>
    %446 = arith.mulf %445, %343 : vector<16x32xf32>
    %447 = arith.addf %440, %446 : vector<16x32xf32>
    %448 = vector.broadcast %8 : vector<1x32xf32> to vector<16x32xf32>
    %449 = arith.subf %0, %448 : vector<16x32xf32>
    %c31_125 = arith.constant 31 : index
    %c0_126 = arith.constant 0 : index
    %450 = vector.load %arg4[%c31_125, %c0_126] : memref<36x32xf32, #tpu.memory_space<vmem>>, vector<1x32xf32>
    %451 = vector.broadcast %450 : vector<1x32xf32> to vector<16x32xf32>
    %452 = arith.mulf %449, %451 : vector<16x32xf32>
    %453 = arith.mulf %452, %343 : vector<16x32xf32>
    %454 = vector.broadcast %12 : vector<1x32xf32> to vector<16x32xf32>
    %455 = arith.subf %454, %0 : vector<16x32xf32>
    %c32 = arith.constant 32 : index
    %c0_127 = arith.constant 0 : index
    %456 = vector.load %arg4[%c32, %c0_127] : memref<36x32xf32, #tpu.memory_space<vmem>>, vector<1x32xf32>
    %457 = vector.broadcast %456 : vector<1x32xf32> to vector<16x32xf32>
    %458 = arith.mulf %455, %457 : vector<16x32xf32>
    %459 = arith.mulf %458, %356 : vector<16x32xf32>
    %460 = arith.addf %453, %459 : vector<16x32xf32>
    %461 = tpu.concatenate %369, %382, %395, %408, %421, %434, %447, %460 in 1 : vector<16x32xf32>, vector<16x32xf32>, vector<16x32xf32>, vector<16x32xf32>, vector<16x32xf32>, vector<16x32xf32>, vector<16x32xf32>, vector<16x32xf32> -> vector<16x256xf32>
    %462 = arith.truncf %461 : vector<16x256xf32> to vector<16x256xbf16>
    %c0_128 = arith.constant 0 : index
    %c0_129 = arith.constant 0 : index
    %463 = vector.load %arg6[%c0_128, %c0_129] : memref<256x96xbf16, #tpu.memory_space<vmem>>, vector<256x96xbf16>
    %cst_130 = arith.constant dense<0.000000e+00> : vector<16x96xf32>
    %464 = tpu.matmul %462, %463, %cst_130 {dimension_numbers = #tpu.dot_dimension_numbers<[1], [0], [0], [1], [0, 0, 1, 1], [], []>} : vector<16x256xbf16>, vector<256x96xbf16>, vector<16x96xf32> -> vector<16x96xf32>
    %465 = arith.addf %21, %464 : vector<16x96xf32>
    %466 = arith.truncf %465 : vector<16x96xf32> to vector<16x96xbf16>
    %c0_131 = arith.constant 0 : index
    %c0_132 = arith.constant 0 : index
    %467 = vector.load %arg7[%c0_131, %c0_132] : memref<16x96xbf16, #tpu.memory_space<vmem>>, vector<16x96xbf16>
    tpu.vector_store %arg7[%c0_131, %c0_132], %466 {strides = array<i32>} : memref<16x96xbf16, #tpu.memory_space<vmem>>, vector<16x96xbf16>,
    return
  }
  func.func @transform_0(%arg0: i32, %arg1: i32) -> (i32, i32) {
    %c0_i32 = arith.constant 0 : i32
    %c0_i32_0 = arith.constant 0 : i32
    return %arg1, %c0_i32 : i32, i32
  }
  func.func @transform_1(%arg0: i32, %arg1: i32) -> (i32, i32) {
    %c0_i32 = arith.constant 0 : i32
    %c0_i32_0 = arith.constant 0 : i32
    %c0_i32_1 = arith.constant 0 : i32
    return %c0_i32, %c0_i32_0 : i32, i32
  }
  func.func @transform_2(%arg0: i32, %arg1: i32) -> (i32, i32) {
    %c0_i32 = arith.constant 0 : i32
    %c0_i32_0 = arith.constant 0 : i32
    %c0_i32_1 = arith.constant 0 : i32
    return %c0_i32, %c0_i32_0 : i32, i32
  }
  func.func @transform_3(%arg0: i32, %arg1: i32) -> (i32, i32) {
    %c0_i32 = arith.constant 0 : i32
    %c0_i32_0 = arith.constant 0 : i32
    return %c0_i32, %arg0 : i32, i32
  }
  func.func @transform_4(%arg0: i32, %arg1: i32) -> (i32, i32) {
    %c0_i32 = arith.constant 0 : i32
    %c0_i32_0 = arith.constant 0 : i32
    return %c0_i32, %arg0 : i32, i32
  }
  func.func @transform_5(%arg0: i32, %arg1: i32) -> (i32, i32) {
    %c0_i32 = arith.constant 0 : i32
    return %arg1, %arg0 : i32, i32
  }
}

</mosaic_0001>

<llo_original>
// kernel: tpu_custom_call.1
$region0: #{tpu_custom_call.1}
  #allocation0 [shape = 'u32[]', space=smem, size = 0x4, offset = 0x4, fixed_abs, tag = 'smem constant byte address 0x4 - core index']
  #allocation1 [shape = 'u32[144,128]{1,0:T(1,128)}', space=vmem, size = 0x12000, scoped, tag = 'internal scratch']
  %s0 = inlined_call_operand.vmem [shape: f32[16,32], index: 0, kind: input, shape index: {}]
  %s1 = inlined_call_operand.vmem [shape: f32[12,32], index: 1, kind: input, shape index: {}]
  %s2 = inlined_call_operand.vmem [shape: f32[36,32], index: 2, kind: input, shape index: {}]
  %s3 = inlined_call_operand.vmem [shape: bf16[32,96], index: 3, kind: input, shape index: {}]
  %s4 = inlined_call_operand.vmem [shape: bf16[256,96], index: 4, kind: input, shape index: {}]
  %s5 = inlined_call_operand.hbm [shape: bf16[16,96], index: 5, kind: output, shape index: {}]
  %s6 = sld [smem:[#allocation0]]
  $region30: #{tpu_custom_call.1} parent=0
    _
  %s8 = ssub.s32 1, %s6
  %s9 = scalar_select 0, %s8, %s6
  $region1: #{tpu_custom_call.1} parent=0
    #allocation2 [shape = 'u8[4096]{0}', space=vmem, size = 0x1000, scoped, tag = 'output window, operand 0, single buffered']
    #allocation3 [shape = 's32[1]{0}', space=sflag, size = 0x4, scoped, tag = 'scoped memory for tpu_custom_call.1']
    %10 = vsyncpa [#allocation3], 0
    // Predicated region
    $region2: #{tpu_custom_call.1} parent=1 // pred_check
      _
    $region3: #{tpu_custom_call.1} parent=1 // pred_check_branch
      %12 = sbr.rel (0) target = $region5
    $region4: #{tpu_custom_call.1} parent=1 // pred_region
      _
    $region5: #{tpu_custom_call.1} parent=1 // pred_fallthru
      _
    // Predicated region
    $region6: #{tpu_custom_call.1} parent=1 // pred_check
      _
    $region7: #{tpu_custom_call.1} parent=1 // pred_check_branch
      %14 = sbr.rel (0) target = $region9
    $region8: #{tpu_custom_call.1} parent=1 // pred_region
      _
    $region9: #{tpu_custom_call.1} parent=1 // pred_fallthru
      _
    // Predicated region
    $region10: #{tpu_custom_call.1} parent=1 // pred_check
      _
    $region11: #{tpu_custom_call.1} parent=1 // pred_check_branch
      %16 = sbr.rel (0) target = $region13
    $region12: #{tpu_custom_call.1} parent=1 // pred_region
      _
    $region13: #{tpu_custom_call.1} parent=1 // pred_fallthru
      _
    // Predicated region
    $region14: #{tpu_custom_call.1} parent=1 // pred_check
      _
    $region15: #{tpu_custom_call.1} parent=1 // pred_check_branch
      %18 = sbr.rel (0) target = $region17
    $region16: #{tpu_custom_call.1} parent=1 // pred_region
      _
    $region17: #{tpu_custom_call.1} parent=1 // pred_fallthru
      _
    // Predicated region
    $region18: #{tpu_custom_call.1} parent=1 // pred_check
      _
    $region19: #{tpu_custom_call.1} parent=1 // pred_check_branch
      %20 = sbr.rel (0) target = $region21
    $region20: #{tpu_custom_call.1} parent=1 // pred_region
      _
    $region21: #{tpu_custom_call.1} parent=1 // pred_fallthru
      _
    %v22 = vld [vmem:[%s0] sm:$0xff]
    %v23 = vld [vmem:[%s0 + $0x8] sm:$0xff]
    %v24 = vld [vmem:[%s1] sm:$0x1]
    %v25 = vld [vmem:[%s1 + $0x1] sm:$0x1]
    %v26 = vld [vmem:[%s1 + $0x2] sm:$0x1]
    %v27 = vld [vmem:[%s1 + $0x3] sm:$0x1]
    %v28 = vld [vmem:[%s1 + $0x4] sm:$0x1]
    %v29 = vld [vmem:[%s1 + $0x5] sm:$0x1]
    %v30 = vld [vmem:[%s1 + $0x6] sm:$0x1]
    %v31 = vld [vmem:[%s1 + $0x7] sm:$0x1]
    %v32 = vld [vmem:[%s1 + $0x8] sm:$0x1]
    %v33 = vld [vmem:[%s1 + $0x9] sm:$0x1]
    %v34 = vld [vmem:[%s1 + $0xa] sm:$0x1]
    %v35 = vld [vmem:[%s1 + $0xb] sm:$0x1]
    %v36 = vxor.u32 %v22, 2147483648
    %v37 = vxor.u32 %v23, 2147483648
    %v38 = vmul.f32 %v36, 1.442695
    %v39 = vpow.pop %v38
    %v40 = vmul.f32 %v37, 1.442695
    %v41 = vpow.pop %v40
    %v42 = vadd.f32 %v39, 1.0
    %v43 = vadd.f32 %v41, 1.0
    %v44 = vrcp.pop %v42
    %v45 = vmul.f32 1.0, %v44
    %v46 = vrcp.pop %v43
    %v47 = vmul.f32 1.0, %v46
    %v48 = vmul.f32 %v22, %v45
    %v49 = vmul.f32 %v23, %v47
    %v50 = vpack.c.bf16 %v49, %v48
    %v51 = vld [vmem:[%s3] sm:$0xf]
    %v52 = vld [vmem:[%s3 + $0x4] sm:$0xf]
    %v53 = vld [vmem:[%s3 + $0x8] sm:$0xf]
    %v54 = vld [vmem:[%s3 + $0xc] sm:$0xf]
    %v55 = vlaneseq
    %v56 = vshrl.u32 %v55, 7
    %v57 = vsub.s32 0, %v56
    %v58 = vrot.slane %v24, %v57
    %vm59 = vcmp.ge.f32.partialorder %v22, %v58
    %vm60 = vcmp.ge.f32.partialorder %v23, %v58
    %v61 = vlaneseq
    %v62 = vshrl.u32 %v61, 7
    %v63 = vsub.s32 0, %v62
    %v64 = vrot.slane %v25, %v63
    %vm65 = vcmp.lt.f32.partialorder %v22, %v64
    %vm66 = vcmp.lt.f32.partialorder %v23, %v64
    %vm67 = vmand %vm59, %vm65
    %vm68 = vmand %vm60, %vm66
    %v69 = vsel %vm67, 1.0, 0.0
    %v70 = vsel %vm68, 1.0, 0.0
    %vm71 = vcmp.ge.f32.partialorder %v22, %v64
    %vm72 = vcmp.ge.f32.partialorder %v23, %v64
    %v73 = vlaneseq
    %v74 = vshrl.u32 %v73, 7
    %v75 = vsub.s32 0, %v74
    %v76 = vrot.slane %v26, %v75
    %vm77 = vcmp.lt.f32.partialorder %v22, %v76
    %vm78 = vcmp.lt.f32.partialorder %v23, %v76
    %vm79 = vmand %vm71, %vm77
    %vm80 = vmand %vm72, %vm78
    %v81 = vsel %vm79, 1.0, 0.0
    %v82 = vsel %vm80, 1.0, 0.0
    %vm83 = vcmp.ge.f32.partialorder %v22, %v76
    %vm84 = vcmp.ge.f32.partialorder %v23, %v76
    %v85 = vlaneseq
    %v86 = vshrl.u32 %v85, 7
    %v87 = vsub.s32 0, %v86
    %v88 = vrot.slane %v27, %v87
    %vm89 = vcmp.lt.f32.partialorder %v22, %v88
    %vm90 = vcmp.lt.f32.partialorder %v23, %v88
    %vm91 = vmand %vm83, %vm89
    %vm92 = vmand %vm84, %vm90
    %v93 = vsel %vm91, 1.0, 0.0
    %v94 = vsel %vm92, 1.0, 0.0
    %vm95 = vcmp.ge.f32.partialorder %v22, %v88
    %vm96 = vcmp.ge.f32.partialorder %v23, %v88
    %v97 = vlaneseq
    %v98 = vshrl.u32 %v97, 7
    %v99 = vsub.s32 0, %v98
    %v100 = vrot.slane %v28, %v99
    %vm101 = vcmp.lt.f32.partialorder %v22, %v100
    %vm102 = vcmp.lt.f32.partialorder %v23, %v100
    %vm103 = vmand %vm95, %vm101
    %vm104 = vmand %vm96, %vm102
    %v105 = vsel %vm103, 1.0, 0.0
    %v106 = vsel %vm104, 1.0, 0.0
    %vm107 = vcmp.ge.f32.partialorder %v22, %v100
    %vm108 = vcmp.ge.f32.partialorder %v23, %v100
    %v109 = vlaneseq
    %v110 = vshrl.u32 %v109, 7
    %v111 = vsub.s32 0, %v110
    %v112 = vrot.slane %v29, %v111
    %vm113 = vcmp.lt.f32.partialorder %v22, %v112
    %vm114 = vcmp.lt.f32.partialorder %v23, %v112
    %vm115 = vmand %vm107, %vm113
    %vm116 = vmand %vm108, %vm114
    %v117 = vsel %vm115, 1.0, 0.0
    %v118 = vsel %vm116, 1.0, 0.0
    %vm119 = vcmp.ge.f32.partialorder %v22, %v112
    %vm120 = vcmp.ge.f32.partialorder %v23, %v112
    %v121 = vlaneseq
    %v122 = vshrl.u32 %v121, 7
    %v123 = vsub.s32 0, %v122
    %v124 = vrot.slane %v30, %v123
    %vm125 = vcmp.lt.f32.partialorder %v22, %v124
    %vm126 = vcmp.lt.f32.partialorder %v23, %v124
    %vm127 = vmand %vm119, %vm125
    %vm128 = vmand %vm120, %vm126
    %v129 = vsel %vm127, 1.0, 0.0
    %v130 = vsel %vm128, 1.0, 0.0
    %vm131 = vcmp.ge.f32.partialorder %v22, %v124
    %vm132 = vcmp.ge.f32.partialorder %v23, %v124
    %v133 = vlaneseq
    %v134 = vshrl.u32 %v133, 7
    %v135 = vsub.s32 0, %v134
    %v136 = vrot.slane %v31, %v135
    %vm137 = vcmp.lt.f32.partialorder %v22, %v136
    %vm138 = vcmp.lt.f32.partialorder %v23, %v136
    %vm139 = vmand %vm131, %vm137
    %vm140 = vmand %vm132, %vm138
    %v141 = vsel %vm139, 1.0, 0.0
    %v142 = vsel %vm140, 1.0, 0.0
    %vm143 = vcmp.ge.f32.partialorder %v22, %v136
    %vm144 = vcmp.ge.f32.partialorder %v23, %v136
    %v145 = vlaneseq
    %v146 = vshrl.u32 %v145, 7
    %v147 = vsub.s32 0, %v146
    %v148 = vrot.slane %v32, %v147
    %vm149 = vcmp.lt.f32.partialorder %v22, %v148
    %vm150 = vcmp.lt.f32.partialorder %v23, %v148
    %vm151 = vmand %vm143, %vm149
    %vm152 = vmand %vm144, %vm150
    %v153 = vsel %vm151, 1.0, 0.0
    %v154 = vsel %vm152, 1.0, 0.0
    %vm155 = vcmp.ge.f32.partialorder %v22, %v148
    %vm156 = vcmp.ge.f32.partialorder %v23, %v148
    %v157 = vlaneseq
    %v158 = vshrl.u32 %v157, 7
    %v159 = vsub.s32 0, %v158
    %v160 = vrot.slane %v33, %v159
    %vm161 = vcmp.lt.f32.partialorder %v22, %v160
    %vm162 = vcmp.lt.f32.partialorder %v23, %v160
    %vm163 = vmand %vm155, %vm161
    %vm164 = vmand %vm156, %vm162
    %v165 = vsel %vm163, 1.0, 0.0
    %v166 = vsel %vm164, 1.0, 0.0
    %vm167 = vcmp.ge.f32.partialorder %v22, %v160
    %vm168 = vcmp.ge.f32.partialorder %v23, %v160
    %v169 = vlaneseq
    %v170 = vshrl.u32 %v169, 7
    %v171 = vsub.s32 0, %v170
    %v172 = vrot.slane %v34, %v171
    %vm173 = vcmp.lt.f32.partialorder %v22, %v172
    %vm174 = vcmp.lt.f32.partialorder %v23, %v172
    %vm175 = vmand %vm167, %vm173
    %vm176 = vmand %vm168, %vm174
    %v177 = vsel %vm175, 1.0, 0.0
    %v178 = vsel %vm176, 1.0, 0.0
    %vm179 = vcmp.ge.f32.partialorder %v22, %v172
    %vm180 = vcmp.ge.f32.partialorder %v23, %v172
    %v181 = vlaneseq
    %v182 = vshrl.u32 %v181, 7
    %v183 = vsub.s32 0, %v182
    %v184 = vrot.slane %v35, %v183
    %vm185 = vcmp.lt.f32.partialorder %v22, %v184
    %vm186 = vcmp.lt.f32.partialorder %v23, %v184
    %vm187 = vmand %vm179, %vm185
    %vm188 = vmand %vm180, %vm186
    %v189 = vsel %vm187, 1.0, 0.0
    %v190 = vsel %vm188, 1.0, 0.0
    %v191 = vsub.f32 %v22, %v58
    %v192 = vsub.f32 %v23, %v58
    %v193 = vld [vmem:[%s2] sm:$0x1]
    %v194 = vlaneseq
    %v195 = vshrl.u32 %v194, 7
    %v196 = vsub.s32 0, %v195
    %v197 = vrot.slane %v193, %v196
    %v198 = vmul.f32 %v191, %v197
    %v199 = vmul.f32 %v192, %v197
    %v200 = vmul.f32 %v198, %v69
    %v201 = vmul.f32 %v199, %v70
    %v202 = vsub.f32 %v76, %v22
    %v203 = vsub.f32 %v76, %v23
    %v204 = vld [vmem:[%s2 + $0x1] sm:$0x1]
    %v205 = vlaneseq
    %v206 = vshrl.u32 %v205, 7
    %v207 = vsub.s32 0, %v206
    %v208 = vrot.slane %v204, %v207
    %v209 = vmul.f32 %v202, %v208
    %v210 = vmul.f32 %v203, %v208
    %v211 = vmul.f32 %v209, %v81
    %v212 = vmul.f32 %v210, %v82
    %v213 = vadd.f32 %v200, %v211
    %v214 = vadd.f32 %v201, %v212
    %v215 = vsub.f32 %v22, %v64
    %v216 = vsub.f32 %v23, %v64
    %v217 = vmul.f32 %v215, %v208
    %v218 = vmul.f32 %v216, %v208
    %v219 = vmul.f32 %v217, %v81
    %v220 = vmul.f32 %v218, %v82
    %v221 = vsub.f32 %v88, %v22
    %v222 = vsub.f32 %v88, %v23
    %v223 = vld [vmem:[%s2 + $0x2] sm:$0x1]
    %v224 = vlaneseq
    %v225 = vshrl.u32 %v224, 7
    %v226 = vsub.s32 0, %v225
    %v227 = vrot.slane %v223, %v226
    %v228 = vmul.f32 %v221, %v227
    %v229 = vmul.f32 %v222, %v227
    %v230 = vmul.f32 %v228, %v93
    %v231 = vmul.f32 %v229, %v94
    %v232 = vadd.f32 %v219, %v230
    %v233 = vadd.f32 %v220, %v231
    %v234 = vsub.f32 %v22, %v76
    %v235 = vsub.f32 %v23, %v76
    %v236 = vmul.f32 %v234, %v227
    %v237 = vmul.f32 %v235, %v227
    %v238 = vmul.f32 %v236, %v93
    %v239 = vmul.f32 %v237, %v94
    %v240 = vsub.f32 %v100, %v22
    %v241 = vsub.f32 %v100, %v23
    %v242 = vld [vmem:[%s2 + $0x3] sm:$0x1]
    %v243 = vlaneseq
    %v244 = vshrl.u32 %v243, 7
    %v245 = vsub.s32 0, %v244
    %v246 = vrot.slane %v242, %v245
    %v247 = vmul.f32 %v240, %v246
    %v248 = vmul.f32 %v241, %v246
    %v249 = vmul.f32 %v247, %v105
    %v250 = vmul.f32 %v248, %v106
    %v251 = vadd.f32 %v238, %v249
    %v252 = vadd.f32 %v239, %v250
    %v253 = vsub.f32 %v22, %v88
    %v254 = vsub.f32 %v23, %v88
    %v255 = vmul.f32 %v253, %v246
    %v256 = vmul.f32 %v254, %v246
    %v257 = vmul.f32 %v255, %v105
    %v258 = vmul.f32 %v256, %v106
    %v259 = vsub.f32 %v112, %v22
    %v260 = vsub.f32 %v112, %v23
    %v261 = vld [vmem:[%s2 + $0x4] sm:$0x1]
    %v262 = vlaneseq
    %v263 = vshrl.u32 %v262, 7
    %v264 = vsub.s32 0, %v263
    %v265 = vrot.slane %v261, %v264
    %v266 = vmul.f32 %v259, %v265
    %v267 = vmul.f32 %v260, %v265
    %v268 = vmul.f32 %v266, %v117
    %v269 = vmul.f32 %v267, %v118
    %v270 = vadd.f32 %v257, %v268
    %v271 = vadd.f32 %v258, %v269
    %v272 = vsub.f32 %v22, %v100
    %v273 = vsub.f32 %v23, %v100
    %v274 = vmul.f32 %v272, %v265
    %v275 = vmul.f32 %v273, %v265
    %v276 = vmul.f32 %v274, %v117
    %v277 = vmul.f32 %v275, %v118
    %v278 = vsub.f32 %v124, %v22
    %v279 = vsub.f32 %v124, %v23
    %v280 = vld [vmem:[%s2 + $0x5] sm:$0x1]
    %v281 = vlaneseq
    %v282 = vshrl.u32 %v281, 7
    %v283 = vsub.s32 0, %v282
    %v284 = vrot.slane %v280, %v283
    %v285 = vmul.f32 %v278, %v284
    %v286 = vmul.f32 %v279, %v284
    %v287 = vmul.f32 %v285, %v129
    %v288 = vmul.f32 %v286, %v130
    %v289 = vadd.f32 %v276, %v287
    %v290 = vadd.f32 %v277, %v288
    %v291 = vsub.f32 %v22, %v112
    %v292 = vsub.f32 %v23, %v112
    %v293 = vmul.f32 %v291, %v284
    %v294 = vmul.f32 %v292, %v284
    %v295 = vmul.f32 %v293, %v129
    %v296 = vmul.f32 %v294, %v130
    %v297 = vsub.f32 %v136, %v22
    %v298 = vsub.f32 %v136, %v23
    %v299 = vld [vmem:[%s2 + $0x6] sm:$0x1]
    %v300 = vlaneseq
    %v301 = vshrl.u32 %v300, 7
    %v302 = vsub.s32 0, %v301
    %v303 = vrot.slane %v299, %v302
    %v304 = vmul.f32 %v297, %v303
    %v305 = vmul.f32 %v298, %v303
    %v306 = vmul.f32 %v304, %v141
    %v307 = vmul.f32 %v305, %v142
    %v308 = vadd.f32 %v295, %v306
    %v309 = vadd.f32 %v296, %v307
    %v310 = vsub.f32 %v22, %v124
    %v311 = vsub.f32 %v23, %v124
    %v312 = vmul.f32 %v310, %v303
    %v313 = vmul.f32 %v311, %v303
    %v314 = vmul.f32 %v312, %v141
    %v315 = vmul.f32 %v313, %v142
    %v316 = vsub.f32 %v148, %v22
    %v317 = vsub.f32 %v148, %v23
    %v318 = vld [vmem:[%s2 + $0x7] sm:$0x1]
    %v319 = vlaneseq
    %v320 = vshrl.u32 %v319, 7
    %v321 = vsub.s32 0, %v320
    %v322 = vrot.slane %v318, %v321
    %v323 = vmul.f32 %v316, %v322
    %v324 = vmul.f32 %v317, %v322
    %v325 = vmul.f32 %v323, %v153
    %v326 = vmul.f32 %v324, %v154
    %v327 = vadd.f32 %v314, %v325
    %v328 = vadd.f32 %v315, %v326
    %v329 = vsub.f32 %v22, %v136
    %v330 = vsub.f32 %v23, %v136
    %v331 = vmul.f32 %v329, %v322
    %v332 = vmul.f32 %v330, %v322
    %v333 = vmul.f32 %v331, %v153
    %v334 = vmul.f32 %v332, %v154
    %v335 = vsub.f32 %v160, %v22
    %v336 = vsub.f32 %v160, %v23
    %v337 = vld [vmem:[%s2 + $0x8] sm:$0x1]
    %v338 = vlaneseq
    %v339 = vshrl.u32 %v338, 7
    %v340 = vsub.s32 0, %v339
    %v341 = vrot.slane %v337, %v340
    %v342 = vmul.f32 %v335, %v341
    %v343 = vmul.f32 %v336, %v341
    %v344 = vmul.f32 %v342, %v165
    %v345 = vmul.f32 %v343, %v166
    %v346 = vadd.f32 %v333, %v344
    %v347 = vadd.f32 %v334, %v345
    %v348 = vsub.f32 %v22, %v148
    %v349 = vsub.f32 %v23, %v148
    %v350 = vmul.f32 %v348, %v341
    %v351 = vmul.f32 %v349, %v341
    %v352 = vmul.f32 %v350, %v165
    %v353 = vmul.f32 %v351, %v166
    %v354 = vsub.f32 %v172, %v22
    %v355 = vsub.f32 %v172, %v23
    %v356 = vld [vmem:[%s2 + $0x9] sm:$0x1]
    %v357 = vlaneseq
    %v358 = vshrl.u32 %v357, 7
    %v359 = vsub.s32 0, %v358
    %v360 = vrot.slane %v356, %v359
    %v361 = vmul.f32 %v354, %v360
    %v362 = vmul.f32 %v355, %v360
    %v363 = vmul.f32 %v361, %v177
    %v364 = vmul.f32 %v362, %v178
    %v365 = vadd.f32 %v352, %v363
    %v366 = vadd.f32 %v353, %v364
    %v367 = vsub.f32 %v22, %v160
    %v368 = vsub.f32 %v23, %v160
    %v369 = vmul.f32 %v367, %v360
    %v370 = vmul.f32 %v368, %v360
    %v371 = vmul.f32 %v369, %v177
    %v372 = vmul.f32 %v370, %v178
    %v373 = vsub.f32 %v184, %v22
    %v374 = vsub.f32 %v184, %v23
    %v375 = vld [vmem:[%s2 + $0xa] sm:$0x1]
    %v376 = vlaneseq
    %v377 = vshrl.u32 %v376, 7
    %v378 = vsub.s32 0, %v377
    %v379 = vrot.slane %v375, %v378
    %v380 = vmul.f32 %v373, %v379
    %v381 = vmul.f32 %v374, %v379
    %v382 = vmul.f32 %v380, %v189
    %v383 = vmul.f32 %v381, %v190
    %v384 = vadd.f32 %v371, %v382
    %v385 = vadd.f32 %v372, %v383
    %v386 = vld [vmem:[%s2 + $0xc] sm:$0x1]
    %v387 = vlaneseq
    %v388 = vshrl.u32 %v387, 7
    %v389 = vsub.s32 0, %v388
    %v390 = vrot.slane %v386, %v389
    %v391 = vmul.f32 %v191, %v390
    %v392 = vmul.f32 %v192, %v390
    %v393 = vmul.f32 %v391, %v213
    %v394 = vmul.f32 %v392, %v214
    %v395 = vld [vmem:[%s2 + $0xd] sm:$0x1]
    %v396 = vlaneseq
    %v397 = vshrl.u32 %v396, 7
    %v398 = vsub.s32 0, %v397
    %v399 = vrot.slane %v395, %v398
    %v400 = vmul.f32 %v221, %v399
    %v401 = vmul.f32 %v222, %v399
    %v402 = vmul.f32 %v400, %v232
    %v403 = vmul.f32 %v401, %v233
    %v404 = vadd.f32 %v393, %v402
    %v405 = vadd.f32 %v394, %v403
    %v406 = vmul.f32 %v215, %v399
    %v407 = vmul.f32 %v216, %v399
    %v408 = vmul.f32 %v406, %v232
    %v409 = vmul.f32 %v407, %v233
    %v410 = vld [vmem:[%s2 + $0xe] sm:$0x1]
    %v411 = vlaneseq
    %v412 = vshrl.u32 %v411, 7
    %v413 = vsub.s32 0, %v412
    %v414 = vrot.slane %v410, %v413
    %v415 = vmul.f32 %v240, %v414
    %v416 = vmul.f32 %v241, %v414
    %v417 = vmul.f32 %v415, %v251
    %v418 = vmul.f32 %v416, %v252
    %v419 = vadd.f32 %v408, %v417
    %v420 = vadd.f32 %v409, %v418
    %v421 = vmul.f32 %v234, %v414
    %v422 = vmul.f32 %v235, %v414
    %v423 = vmul.f32 %v421, %v251
    %v424 = vmul.f32 %v422, %v252
    %v425 = vld [vmem:[%s2 + $0xf] sm:$0x1]
    %v426 = vlaneseq
    %v427 = vshrl.u32 %v426, 7
    %v428 = vsub.s32 0, %v427
    %v429 = vrot.slane %v425, %v428
    %v430 = vmul.f32 %v259, %v429
    %v431 = vmul.f32 %v260, %v429
    %v432 = vmul.f32 %v430, %v270
    %v433 = vmul.f32 %v431, %v271
    %v434 = vadd.f32 %v423, %v432
    %v435 = vadd.f32 %v424, %v433
    %v436 = vmul.f32 %v253, %v429
    %v437 = vmul.f32 %v254, %v429
    %v438 = vmul.f32 %v436, %v270
    %v439 = vmul.f32 %v437, %v271
    %v440 = vld [vmem:[%s2 + $0x10] sm:$0x1]
    %v441 = vlaneseq
    %v442 = vshrl.u32 %v441, 7
    %v443 = vsub.s32 0, %v442
    %v444 = vrot.slane %v440, %v443
    %v445 = vmul.f32 %v278, %v444
    %v446 = vmul.f32 %v279, %v444
    %v447 = vmul.f32 %v445, %v289
    %v448 = vmul.f32 %v446, %v290
    %v449 = vadd.f32 %v438, %v447
    %v450 = vadd.f32 %v439, %v448
    %v451 = vmul.f32 %v272, %v444
    %v452 = vmul.f32 %v273, %v444
    %v453 = vmul.f32 %v451, %v289
    %v454 = vmul.f32 %v452, %v290
    %v455 = vld [vmem:[%s2 + $0x11] sm:$0x1]
    %v456 = vlaneseq
    %v457 = vshrl.u32 %v456, 7
    %v458 = vsub.s32 0, %v457
    %v459 = vrot.slane %v455, %v458
    %v460 = vmul.f32 %v297, %v459
    %v461 = vmul.f32 %v298, %v459
    %v462 = vmul.f32 %v460, %v308
    %v463 = vmul.f32 %v461, %v309
    %v464 = vadd.f32 %v453, %v462
    %v465 = vadd.f32 %v454, %v463
    %v466 = vmul.f32 %v291, %v459
    %v467 = vmul.f32 %v292, %v459
    %v468 = vmul.f32 %v466, %v308
    %v469 = vmul.f32 %v467, %v309
    %v470 = vld [vmem:[%s2 + $0x12] sm:$0x1]
    %v471 = vlaneseq
    %v472 = vshrl.u32 %v471, 7
    %v473 = vsub.s32 0, %v472
    %v474 = vrot.slane %v470, %v473
    %v475 = vmul.f32 %v316, %v474
    %v476 = vmul.f32 %v317, %v474
    %v477 = vmul.f32 %v475, %v327
    %v478 = vmul.f32 %v476, %v328
    %v479 = vadd.f32 %v468, %v477
    %v480 = vadd.f32 %v469, %v478
    %v481 = vmul.f32 %v310, %v474
    %v482 = vmul.f32 %v311, %v474
    %v483 = vmul.f32 %v481, %v327
    %v484 = vmul.f32 %v482, %v328
    %v485 = vld [vmem:[%s2 + $0x13] sm:$0x1]
    %v486 = vlaneseq
    %v487 = vshrl.u32 %v486, 7
    %v488 = vsub.s32 0, %v487
    %v489 = vrot.slane %v485, %v488
    %v490 = vmul.f32 %v335, %v489
    %v491 = vmul.f32 %v336, %v489
    %v492 = vmul.f32 %v490, %v346
    %v493 = vmul.f32 %v491, %v347
    %v494 = vadd.f32 %v483, %v492
    %v495 = vadd.f32 %v484, %v493
    %v496 = vmul.f32 %v329, %v489
    %v497 = vmul.f32 %v330, %v489
    %v498 = vmul.f32 %v496, %v346
    %v499 = vmul.f32 %v497, %v347
    %v500 = vld [vmem:[%s2 + $0x14] sm:$0x1]
    %v501 = vlaneseq
    %v502 = vshrl.u32 %v501, 7
    %v503 = vsub.s32 0, %v502
    %v504 = vrot.slane %v500, %v503
    %v505 = vmul.f32 %v354, %v504
    %v506 = vmul.f32 %v355, %v504
    %v507 = vmul.f32 %v505, %v365
    %v508 = vmul.f32 %v506, %v366
    %v509 = vadd.f32 %v498, %v507
    %v510 = vadd.f32 %v499, %v508
    %v511 = vmul.f32 %v348, %v504
    %v512 = vmul.f32 %v349, %v504
    %v513 = vmul.f32 %v511, %v365
    %v514 = vmul.f32 %v512, %v366
    %v515 = vld [vmem:[%s2 + $0x15] sm:$0x1]
    %v516 = vlaneseq
    %v517 = vshrl.u32 %v516, 7
    %v518 = vsub.s32 0, %v517
    %v519 = vrot.slane %v515, %v518
    %v520 = vmul.f32 %v373, %v519
    %v521 = vmul.f32 %v374, %v519
    %v522 = vmul.f32 %v520, %v384
    %v523 = vmul.f32 %v521, %v385
    %v524 = vadd.f32 %v513, %v522
    %v525 = vadd.f32 %v514, %v523
    %v526 = vld [vmem:[%s2 + $0x18] sm:$0x1]
    %v527 = vlaneseq
    %v528 = vshrl.u32 %v527, 7
    %v529 = vsub.s32 0, %v528
    %v530 = vrot.slane %v526, %v529
    %v531 = vmul.f32 %v191, %v530
    %v532 = vmul.f32 %v192, %v530
    %v533 = vmul.f32 %v531, %v404
    %v534 = vmul.f32 %v532, %v405
    %v535 = vld [vmem:[%s2 + $0x19] sm:$0x1]
    %v536 = vlaneseq
    %v537 = vshrl.u32 %v536, 7
    %v538 = vsub.s32 0, %v537
    %v539 = vrot.slane %v535, %v538
    %v540 = vmul.f32 %v240, %v539
    %v541 = vmul.f32 %v241, %v539
    %v542 = vmul.f32 %v540, %v419
    %v543 = vmul.f32 %v541, %v420
    %v544 = vadd.f32 %v533, %v542
    %v545 = vadd.f32 %v534, %v543
    %v546 = vmul.f32 %v215, %v539
    %v547 = vmul.f32 %v216, %v539
    %v548 = vmul.f32 %v546, %v419
    %v549 = vmul.f32 %v547, %v420
    %v550 = vld [vmem:[%s2 + $0x1a] sm:$0x1]
    %v551 = vlaneseq
    %v552 = vshrl.u32 %v551, 7
    %v553 = vsub.s32 0, %v552
    %v554 = vrot.slane %v550, %v553
    %v555 = vmul.f32 %v259, %v554
    %v556 = vmul.f32 %v260, %v554
    %v557 = vmul.f32 %v555, %v434
    %v558 = vmul.f32 %v556, %v435
    %v559 = vadd.f32 %v548, %v557
    %v560 = vadd.f32 %v549, %v558
    %v561 = vmul.f32 %v234, %v554
    %v562 = vmul.f32 %v235, %v554
    %v563 = vmul.f32 %v561, %v434
    %v564 = vmul.f32 %v562, %v435
    %v565 = vld [vmem:[%s2 + $0x1b] sm:$0x1]
    %v566 = vlaneseq
    %v567 = vshrl.u32 %v566, 7
    %v568 = vsub.s32 0, %v567
    %v569 = vrot.slane %v565, %v568
    %v570 = vmul.f32 %v278, %v569
    %v571 = vmul.f32 %v279, %v569
    %v572 = vmul.f32 %v570, %v449
    %v573 = vmul.f32 %v571, %v450
    %v574 = vadd.f32 %v563, %v572
    %v575 = vadd.f32 %v564, %v573
    %v576 = vmul.f32 %v253, %v569
    %v577 = vmul.f32 %v254, %v569
    %v578 = vmul.f32 %v576, %v449
    %v579 = vmul.f32 %v577, %v450
    %v580 = vld [vmem:[%s2 + $0x1c] sm:$0x1]
    %v581 = vlaneseq
    %v582 = vshrl.u32 %v581, 7
    %v583 = vsub.s32 0, %v582
    %v584 = vrot.slane %v580, %v583
    %v585 = vmul.f32 %v297, %v584
    %v586 = vmul.f32 %v298, %v584
    %v587 = vmul.f32 %v585, %v464
    %v588 = vmul.f32 %v586, %v465
    %v589 = vadd.f32 %v578, %v587
    %v590 = vadd.f32 %v579, %v588
    %v591 = vmul.f32 %v272, %v584
    %v592 = vmul.f32 %v273, %v584
    %v593 = vmul.f32 %v591, %v464
    %v594 = vmul.f32 %v592, %v465
    %v595 = vld [vmem:[%s2 + $0x1d] sm:$0x1]
    %v596 = vlaneseq
    %v597 = vshrl.u32 %v596, 7
    %v598 = vsub.s32 0, %v597
    %v599 = vrot.slane %v595, %v598
    %v600 = vmul.f32 %v316, %v599
    %v601 = vmul.f32 %v317, %v599
    %v602 = vmul.f32 %v600, %v479
    %v603 = vmul.f32 %v601, %v480
    %v604 = vadd.f32 %v593, %v602
    %v605 = vadd.f32 %v594, %v603
    %v606 = vmul.f32 %v291, %v599
    %v607 = vmul.f32 %v292, %v599
    %v608 = vmul.f32 %v606, %v479
    %v609 = vmul.f32 %v607, %v480
    %v610 = vld [vmem:[%s2 + $0x1e] sm:$0x1]
    %v611 = vlaneseq
    %v612 = vshrl.u32 %v611, 7
    %v613 = vsub.s32 0, %v612
    %v614 = vrot.slane %v610, %v613
    %v615 = vmul.f32 %v335, %v614
    %v616 = vmul.f32 %v336, %v614
    %v617 = vmul.f32 %v615, %v494
    %v618 = vmul.f32 %v616, %v495
    %v619 = vadd.f32 %v608, %v617
    %v620 = vadd.f32 %v609, %v618
    %v621 = vmul.f32 %v310, %v614
    %v622 = vmul.f32 %v311, %v614
    %v623 = vmul.f32 %v621, %v494
    %v624 = vmul.f32 %v622, %v495
    %v625 = vld [vmem:[%s2 + $0x1f] sm:$0x1]
    %v626 = vlaneseq
    %v627 = vshrl.u32 %v626, 7
    %v628 = vsub.s32 0, %v627
    %v629 = vrot.slane %v625, %v628
    %v630 = vmul.f32 %v354, %v629
    %v631 = vmul.f32 %v355, %v629
    %v632 = vmul.f32 %v630, %v509
    %v633 = vmul.f32 %v631, %v510
    %v634 = vadd.f32 %v623, %v632
    %v635 = vadd.f32 %v624, %v633
    %v636 = vmul.f32 %v329, %v629
    %v637 = vmul.f32 %v330, %v629
    %v638 = vmul.f32 %v636, %v509
    %v639 = vmul.f32 %v637, %v510
    %v640 = vld [vmem:[%s2 + $0x20] sm:$0x1]
    %v641 = vlaneseq
    %v642 = vshrl.u32 %v641, 7
    %v643 = vsub.s32 0, %v642
    %v644 = vrot.slane %v640, %v643
    %v645 = vmul.f32 %v373, %v644
    %v646 = vmul.f32 %v374, %v644
    %v647 = vmul.f32 %v645, %v524
    %v648 = vmul.f32 %v646, %v525
    %v649 = vadd.f32 %v638, %v647
    %v650 = vadd.f32 %v639, %v648
    %653 = vrot.lane.b32.xlu0 %v559, 32
    %v654 = vpop.permute.xlu0 %653
    %655 = vrot.lane.b32.xlu0 %v560, 32
    %v656 = vpop.permute.xlu0 %655
    %661 = vrot.lane.b32.xlu0 %v574, 64
    %v662 = vpop.permute.xlu0 %661
    %663 = vrot.lane.b32.xlu0 %v575, 64
    %v664 = vpop.permute.xlu0 %663
    %669 = vrot.lane.b32.xlu0 %v589, 96
    %v670 = vpop.permute.xlu0 %669
    %671 = vrot.lane.b32.xlu0 %v590, 96
    %v672 = vpop.permute.xlu0 %671
    %677 = vrot.lane.b32.xlu0 %v619, 32
    %v678 = vpop.permute.xlu0 %677
    %679 = vrot.lane.b32.xlu0 %v620, 32
    %v680 = vpop.permute.xlu0 %679
    %685 = vrot.lane.b32.xlu0 %v634, 64
    %v686 = vpop.permute.xlu0 %685
    %687 = vrot.lane.b32.xlu0 %v635, 64
    %v688 = vpop.permute.xlu0 %687
    %693 = vrot.lane.b32.xlu0 %v649, 96
    %v694 = vpop.permute.xlu0 %693
    %695 = vrot.lane.b32.xlu0 %v650, 96
    %v696 = vpop.permute.xlu0 %695
    %vm699 = vcmask 261120
    %v700 = vsel %vm699, %v544, %v654
    %v701 = vsel %vm699, %v545, %v656
    %vm702 = vcmask 523264
    %v703 = vsel %vm702, %v700, %v662
    %v704 = vsel %vm702, %v701, %v664
    %vm705 = vcmask 785408
    %v706 = vsel %vm705, %v703, %v670
    %v707 = vsel %vm705, %v704, %v672
    %v708 = vsel %vm699, %v604, %v678
    %v709 = vsel %vm699, %v605, %v680
    %v710 = vsel %vm702, %v708, %v686
    %v711 = vsel %vm702, %v709, %v688
    %v712 = vsel %vm705, %v710, %v694
    %v713 = vsel %vm705, %v711, %v696
    %v714 = vpack.c.bf16 %v707, %v706
    %v715 = vpack.c.bf16 %v713, %v712
    %v716 = vld [vmem:[%s4] sm:$0xf]
    %v717 = vld [vmem:[%s4 + $0x4] sm:$0xf]
    %v718 = vld [vmem:[%s4 + $0x8] sm:$0xf]
    %v719 = vld [vmem:[%s4 + $0xc] sm:$0xf]
    %v720 = vld [vmem:[%s4 + $0x10] sm:$0xf]
    %v721 = vld [vmem:[%s4 + $0x14] sm:$0xf]
    %v722 = vld [vmem:[%s4 + $0x18] sm:$0xf]
    %v723 = vld [vmem:[%s4 + $0x1c] sm:$0xf]
    %v724 = vld [vmem:[%s4 + $0x20] sm:$0xf]
    %v725 = vld [vmem:[%s4 + $0x24] sm:$0xf]
    %v726 = vld [vmem:[%s4 + $0x28] sm:$0xf]
    %v727 = vld [vmem:[%s4 + $0x2c] sm:$0xf]
    %v728 = vld [vmem:[%s4 + $0x30] sm:$0xf]
    %v729 = vld [vmem:[%s4 + $0x34] sm:$0xf]
    %v730 = vld [vmem:[%s4 + $0x38] sm:$0xf]
    %v731 = vld [vmem:[%s4 + $0x3c] sm:$0xf]
    %v732 = vld [vmem:[%s4 + $0x40] sm:$0xf]
    %v733 = vld [vmem:[%s4 + $0x44] sm:$0xf]
    %v734 = vld [vmem:[%s4 + $0x48] sm:$0xf]
    %v735 = vld [vmem:[%s4 + $0x4c] sm:$0xf]
    %v736 = vld [vmem:[%s4 + $0x50] sm:$0xf]
    %v737 = vld [vmem:[%s4 + $0x54] sm:$0xf]
    %v738 = vld [vmem:[%s4 + $0x58] sm:$0xf]
    %v739 = vld [vmem:[%s4 + $0x5c] sm:$0xf]
    %v740 = vld [vmem:[%s4 + $0x60] sm:$0xf]
    %v741 = vld [vmem:[%s4 + $0x64] sm:$0xf]
    %v742 = vld [vmem:[%s4 + $0x68] sm:$0xf]
    %v743 = vld [vmem:[%s4 + $0x6c] sm:$0xf]
    %v744 = vld [vmem:[%s4 + $0x70] sm:$0xf]
    %v745 = vld [vmem:[%s4 + $0x74] sm:$0xf]
    %v746 = vld [vmem:[%s4 + $0x78] sm:$0xf]
    %v747 = vld [vmem:[%s4 + $0x7c] sm:$0xf]
    %v780 = vunpack.c.l.b16 %v716
    %v781 = vunpack.c.l.b16 %v717
    %v782 = vunpack.c.l.b16 %v718
    %v783 = vunpack.c.l.b16 %v719
    %v784 = vunpack.c.l.b16 %v720
    %v785 = vunpack.c.l.b16 %v721
    %v786 = vunpack.c.l.b16 %v722
    %v787 = vunpack.c.l.b16 %v723
    %v788 = vunpack.c.l.b16 %v724
    %v789 = vunpack.c.l.b16 %v725
    %v790 = vunpack.c.l.b16 %v726
    %v791 = vunpack.c.l.b16 %v727
    %v792 = vunpack.c.l.b16 %v728
    %v793 = vunpack.c.l.b16 %v729
    %v794 = vunpack.c.l.b16 %v730
    %v795 = vunpack.c.l.b16 %v731
    %v796 = vunpack.c.l.b16 %v732
    %v797 = vunpack.c.l.b16 %v733
    %v798 = vunpack.c.l.b16 %v734
    %v799 = vunpack.c.l.b16 %v735
    %v800 = vunpack.c.l.b16 %v736
    %v801 = vunpack.c.l.b16 %v737
    %v802 = vunpack.c.l.b16 %v738
    %v803 = vunpack.c.l.b16 %v739
    %v804 = vunpack.c.l.b16 %v740
    %v805 = vunpack.c.l.b16 %v741
    %v806 = vunpack.c.l.b16 %v742
    %v807 = vunpack.c.l.b16 %v743
    %v808 = vunpack.c.l.b16 %v744
    %v809 = vunpack.c.l.b16 %v745
    %v810 = vunpack.c.l.b16 %v746
    %v811 = vunpack.c.l.b16 %v747
    %v812 = vpack.c.b16 %v781, %v780
    %v813 = vpack.c.b16 %v783, %v782
    %v814 = vpack.c.b16 %v785, %v784
    %v815 = vpack.c.b16 %v787, %v786
    %v816 = vpack.c.b16 %v789, %v788
    %v817 = vpack.c.b16 %v791, %v790
    %v818 = vpack.c.b16 %v793, %v792
    %v819 = vpack.c.b16 %v795, %v794
    %v820 = vpack.c.b16 %v797, %v796
    %v821 = vpack.c.b16 %v799, %v798
    %v822 = vpack.c.b16 %v801, %v800
    %v823 = vpack.c.b16 %v803, %v802
    %v824 = vpack.c.b16 %v805, %v804
    %v825 = vpack.c.b16 %v807, %v806
    %v826 = vpack.c.b16 %v809, %v808
    %v827 = vpack.c.b16 %v811, %v810
    %844 = vmatprep.subr.bf16.mxu0 0
    %845 = vmatpush1.bf16.msra.mxu0 %v812
    %846 = vmatprep.subr.bf16.mxu0 0
    %847 = vmatpush1.bf16.msra.mxu0 %v813
    %848 = vmatprep.subr.bf16.mxu0 0
    %849 = vmatpush1.bf16.msra.mxu0 %v814
    %850 = vmatprep.subr.bf16.mxu0 0
    %851 = vmatpush1.bf16.msra.mxu0 %v815
    %852 = vmatprep.subr.bf16.mxu0 0
    %853 = vmatpush1.bf16.msra.mxu0 %v816
    %854 = vmatprep.subr.bf16.mxu0 0
    %855 = vmatpush1.bf16.msra.mxu0 %v817
    %856 = vmatprep.subr.bf16.mxu0 0
    %857 = vmatpush1.bf16.msra.mxu0 %v818
    %858 = vmatprep.subr.bf16.mxu0 0
    %859 = vmatpush1.bf16.msra.mxu0 %v819
    %860 = vmatprep.subr.bf16.mxu0 0
    %861 = vmatpush1.bf16.msra.mxu0 %v820
    %862 = vmatprep.subr.bf16.mxu0 0
    %863 = vmatpush1.bf16.msra.mxu0 %v821
    %864 = vmatprep.subr.bf16.mxu0 0
    %865 = vmatpush1.bf16.msra.mxu0 %v822
    %866 = vmatprep.subr.bf16.mxu0 0
    %867 = vmatpush1.bf16.msra.mxu0 %v823
    %868 = vmatprep.subr.bf16.mxu0 0
    %869 = vmatpush1.bf16.msra.mxu0 %v824
    %870 = vmatprep.subr.bf16.mxu0 0
    %871 = vmatpush1.bf16.msra.mxu0 %v825
    %872 = vmatprep.subr.bf16.mxu0 0
    %873 = vmatpush1.bf16.msra.mxu0 %v826
    %874 = vmatprep.subr.bf16.mxu0 0
    %875 = vmatpush1.bf16.msra.mxu0 %v827
    %876 = vmatprep.mubr.bf16.mxu0 %v715
    %877 = vmatmul.mubr.bf16.gmra.mrb[0].mxu0 %v714
    %v878 = vpop.f32.mrb[0].mxu0
    %v879 = vadd.f32 0.0, %v878
    %v880 = vpop.f32.mrb[0].mxu0
    %v881 = vpop.f32.mrb[0].mxu0
    %v882 = vadd.f32 0.0, %v881
    %v883 = vpop.f32.mrb[0].mxu0
    %884 = vdwg.mxu0
    %v889 = vunpack.c.l.b16 %v51
    %v890 = vunpack.c.l.b16 %v52
    %v891 = vunpack.c.l.b16 %v53
    %v892 = vunpack.c.l.b16 %v54
    %v893 = vpack.c.b16 %v890, %v889
    %v894 = vpack.c.b16 %v892, %v891
    %v898 = vsel %vm699, %v50, 0
    %900 = vmatprep.subr.bf16.mxu0 0
    %901 = vmatpush1.bf16.msra.mxu0 %v893
    %902 = vmatprep.subr.bf16.mxu0 0
    %903 = vmatpush1.bf16.msra.mxu0 %v894
    %904 = vmatprep.subr.bf16.mxu0 0
    %905 = vmatpush1.bf16.msra.mxu0 0
    %906 = vmatprep.subr.bf16.mxu0 0
    %907 = vmatpush1.bf16.msra.mxu0 0
    %908 = vmatprep.subr.bf16.mxu0 0
    %909 = vmatpush1.bf16.msra.mxu0 0
    %910 = vmatprep.subr.bf16.mxu0 0
    %911 = vmatpush1.bf16.msra.mxu0 0
    %912 = vmatprep.subr.bf16.mxu0 0
    %913 = vmatpush1.bf16.msra.mxu0 0
    %914 = vmatprep.subr.bf16.mxu0 0
    %915 = vmatpush1.bf16.msra.mxu0 0
    %916 = vmatprep.subr.bf16.mxu0 0
    %917 = vmatpush1.bf16.msra.mxu0 0
    %918 = vmatprep.subr.bf16.mxu0 0
    %919 = vmatpush1.bf16.msra.mxu0 0
    %920 = vmatprep.subr.bf16.mxu0 0
    %921 = vmatpush1.bf16.msra.mxu0 0
    %922 = vmatprep.subr.bf16.mxu0 0
    %923 = vmatpush1.bf16.msra.mxu0 0
    %924 = vmatprep.subr.bf16.mxu0 0
    %925 = vmatpush1.bf16.msra.mxu0 0
    %926 = vmatprep.subr.bf16.mxu0 0
    %927 = vmatpush1.bf16.msra.mxu0 0
    %928 = vmatprep.subr.bf16.mxu0 0
    %929 = vmatpush1.bf16.msra.mxu0 0
    %930 = vmatprep.subr.bf16.mxu0 0
    %931 = vmatpush1.bf16.msra.mxu0 0
    %932 = vmatprep.mubr.bf16.mxu0 0
    %933 = vmatmul.mubr.bf16.gmra.mrb[0].mxu0 %v898
    %v934 = vpop.f32.mrb[0].mxu0
    %v935 = vadd.f32 %v879, %v934
    %v936 = vpop.f32.mrb[0].mxu0
    %v937 = vpop.f32.mrb[0].mxu0
    %v938 = vadd.f32 %v882, %v937
    %v939 = vpop.f32.mrb[0].mxu0
    %940 = vdwg.mxu0
    %v941 = vpack.c.bf16 %v938, %v935
    %v943 = vunpack.c.l.b16 %v941
    %v944 = vunpack.c.h.b16 %v941
    %v945 = vpack.c.b16 %v943, %v943
    %v946 = vpack.c.b16 %v944, %v944
    %vm949 = vcmask 781312
    %950 = vst.msk [vmem:[#allocation2] sm:$0xf] %vm949, %v945
    %951 = vst.msk [vmem:[#allocation2 + $0x4] sm:$0xf] %vm949, %v946
    // Predicated region
    $region22: #{tpu_custom_call.1} parent=1 // pred_check
      _
    $region23: #{tpu_custom_call.1} parent=1 // pred_check_branch
      %953 = sbr.rel (0) target = $region25
    $region24: #{tpu_custom_call.1} parent=1 // pred_region
      %s955 = ssub.s32 128, 128
      %956 = vsyncadd [#allocation3], %s955
      %s957 = sshll.u32 [#allocation2], 4
      %s958 = int_to_ptr.vmem [resolvable:$true] %s957
      %963 = dma.vmem_to_hbm [thread:$0]  %s958, 128, %s5, [#allocation3], 64, 64, 4
    $region25: #{tpu_custom_call.1} parent=1 // pred_fallthru
      _
    // Predicated region
    $region26: #{tpu_custom_call.1} parent=1 // pred_check
      _
    $region27: #{tpu_custom_call.1} parent=1 // pred_check_branch
      %965 = sbr.rel (0) target = $region29
    $region28: #{tpu_custom_call.1} parent=1 // pred_region
      %966 = dma.done [#allocation3], 128
    $region29: #{tpu_custom_call.1} parent=1 // pred_fallthru
      _
    %967 = vsyncpa [#allocation3], 1

</llo_original>
